<compile_context>
chip_gen: v7x
topology: tpu7x:2x2x1
jax: 0.10.0
libtpu: 0.0.40
codegen_flags: <defaults>
</compile_context>

<pallas_src>
import functools

import jax
import jax.numpy as jnp
from jax.experimental import pallas as pl
from jax.experimental.pallas import tpu as pltpu


_ATT_PAD = 128  # lane-padded width of the fused attention-score projection


def _gat_flash_kernel(xi_ref, xj_ref, wT_ref, attn_ref, out_ref,
                      m_sc, l_sc, acc_sc, *, H, F, slope, approx_recip):
    """One (batch, i-tile, j-tile) grid step of the GAT forward.

    xi_ref:   (1, TI, Din)  query-side node tile (rows "i"), compute dtype
    xj_ref:   (1, TJ, Din)  key/value-side node tile (rows "j"), compute dtype
    wT_ref:   (Din, H*F)    linear_vert weight, transposed, compute dtype
    attn_ref: (H*F, 128)    block-diagonal attention projection:
                            column h   -> w_src for head h,
                            column H+h -> w_dst for head h, rest zero
    out_ref:  (1, TI, H*F)  concatenated per-head outputs (written at j == last)
    m_sc/l_sc: (H, TI, 1)   online-softmax running max / running sum (f32)
    acc_sc:    (H, TI, F)   online-softmax running weighted sum (f32)
    """
    j = pl.program_id(2)
    nj = pl.num_programs(2)
    cd = wT_ref.dtype  # MXU operand dtype (bf16 on the perf path, f32 otherwise)

    @pl.when(j == 0)
    def _():
        m_sc[...] = jnp.full_like(m_sc, -jnp.inf)
        l_sc[...] = jnp.zeros_like(l_sc)
        acc_sc[...] = jnp.zeros_like(acc_sc)

    wT = wT_ref[...]
    A = attn_ref[...]

    # g = linear_vert(x), recomputed per tile (Din << tile size => cheap), f32 acc.
    g_i = jnp.dot(xi_ref[0], wT, preferred_element_type=jnp.float32)   # (TI, HF)
    g_j = jnp.dot(xj_ref[0], wT, preferred_element_type=jnp.float32)   # (TJ, HF)

    # All heads' src/dst attention scores via one padded MXU matmul each.
    sc_i = jnp.dot(g_i.astype(cd), A, preferred_element_type=jnp.float32)  # (TI, 128)
    sc_j = jnp.dot(g_j.astype(cd), A, preferred_element_type=jnp.float32)  # (TJ, 128)
    s_dst_t = jnp.transpose(sc_j[:, H:2 * H])     # (H, TJ) — one small XLU transpose

    g_j_cd = g_j.astype(cd)

    for h in range(H):  # H is a small static constant
        # e[i, j] = leaky_relu(g[i]·w_src + g[j]·w_dst), tile of shape (TI, TJ)
        e = sc_i[:, h:h + 1] + s_dst_t[h:h + 1, :]
        e = jnp.where(e > 0, e, slope * e)

        # online softmax over j (matches nn.Softmax(dim=-2) on [B, i, j, H])
        m_prev = m_sc[h]                                              # (TI, 1)
        m_new = jnp.maximum(m_prev, jnp.max(e, axis=1, keepdims=True))
        alpha = jnp.exp(m_prev - m_new)                               # (TI, 1)
        p = jnp.exp(e - m_new)                                        # (TI, TJ)
        l_sc[h] = alpha * l_sc[h] + jnp.sum(p, axis=1, keepdims=True)
        acc_sc[h] = alpha * acc_sc[h] + jnp.dot(
            p.astype(cd), g_j_cd[:, h * F:(h + 1) * F],
            preferred_element_type=jnp.float32)                       # (TI, F)
        m_sc[h] = m_new

    @pl.when(j == nj - 1)
    def _():
        # Normalize and write each head's slice in place (no concatenate, no
        # extra live per-head buffers).
        for h in range(H):
            inv_l = pl.reciprocal(l_sc[h], approx=approx_recip)       # (TI, 1)
            out_ref[0, :, h * F:(h + 1) * F] = (
                acc_sc[h] * inv_l).astype(out_ref.dtype)


def _choose_tile(n, max_tile):
    """Largest tile <= max_tile that evenly covers n and keeps (8,128) tiling legal."""
    if n <= max_tile:
        return n                        # full extent is always a legal block dim
    t = (max_tile // 8) * 8
    while t >= 8:
        if n % t == 0:
            return t
        t -= 8
    return n                            # fallback: no tiling along this axis


def gat_layer_batch(vertex, w_vert, attn_w, *, n_heads, is_concat=True,
                    negative_slope=0.2, use_bf16_mxu=True,
                    ti_max=256, tj_max=512):
    """Pallas implementation of _gat_layer_batch.forward (eval mode).

    vertex: [B, N, Din]
    w_vert: [H*F, Din]   (PyTorch nn.Linear weight layout for linear_vert)
    attn_w: [1, 2*F]     (PyTorch nn.Linear weight layout for attn)

    use_bf16_mxu: cast MXU operands to bf16 (f32 accumulate) and use the approx
                  EUP reciprocal — the fast path on bf16-native MXUs (v5e/v6e/v7x).
    ti_max/tj_max: attention tile caps.  Defaults (256, 512) fit comfortably in
                  v7x's 64 MiB VMEM; on v5e/v6e (128 MiB) larger j-tiles are fine.
    """
    B, N, Din = vertex.shape
    HF = w_vert.shape[0]
    H = n_heads
    assert HF % H == 0
    F = HF // H
    assert 2 * H <= _ATT_PAD, "too many heads for the padded score projection"

    cd = jnp.bfloat16 if use_bf16_mxu else jnp.float32

    # Cast once in the wrapper so DMA'd bytes are halved on the bf16 path.
    x = vertex.astype(cd)
    wT = jnp.transpose(w_vert).astype(cd)          # (Din, H*F)

    # Block-diagonal attention projection: (g @ A)[:, h] = g_h · w_src,
    #                                      (g @ A)[:, H+h] = g_h · w_dst.
    w_src = attn_w[0, :F]
    w_dst = attn_w[0, F:]
    A = jnp.zeros((HF, _ATT_PAD), jnp.float32)
    for h in range(H):
        A = A.at[h * F:(h + 1) * F, h].set(w_src)
        A = A.at[h * F:(h + 1) * F, H + h].set(w_dst)
    A = A.astype(cd)

    TI = _choose_tile(N, ti_max)
    TJ = _choose_tile(N, tj_max)
    nI, nJ = N // TI, N // TJ

    kernel = functools.partial(_gat_flash_kernel, H=H, F=F,
                               slope=negative_slope,
                               approx_recip=use_bf16_mxu)

    out = pl.pallas_call(
        kernel,
        out_shape=jax.ShapeDtypeStruct((B, N, HF), vertex.dtype),
        grid_spec=pltpu.PrefetchScalarGridSpec(
            num_scalar_prefetch=0,
            grid=(B, nI, nJ),
            in_specs=[
                pl.BlockSpec((1, TI, Din), lambda b, i, j: (b, i, 0)),  # x, i-tile
                pl.BlockSpec((1, TJ, Din), lambda b, i, j: (b, j, 0)),  # x, j-tile
                pl.BlockSpec((Din, HF), lambda b, i, j: (0, 0)),        # wT
                pl.BlockSpec((HF, _ATT_PAD), lambda b, i, j: (0, 0)),   # attn proj
            ],
            out_specs=pl.BlockSpec((1, TI, HF), lambda b, i, j: (b, i, 0)),
            scratch_shapes=[
                pltpu.VMEM((H, TI, 1), jnp.float32),   # m (running max)
                pltpu.VMEM((H, TI, 1), jnp.float32),   # l (running sum)
                pltpu.VMEM((H, TI, F), jnp.float32),   # acc (running weighted sum)
            ]),
        compiler_params=pltpu.CompilerParams(
            dimension_semantics=("parallel", "parallel", "arbitrary"),
            vmem_limit_bytes=48 * 1024 * 1024),
    )(x, x, wT, A)

    if is_concat:
        return out                                          # [B, N, H*F]
    # is_concat=False path of the module: attr_res.mean(dim=-1) — mean over the
    # *hidden* dim F (that is literally what the PyTorch code does), -> [B, N, H].
    return out.reshape(B, N, H, F).mean(axis=-1)


def _reference(vertex, w_vert, attn_w, n_heads, is_concat, slope):
    """Pure-JAX f32 reference mirroring the PyTorch forward (eval mode)."""
    B, N, _ = vertex.shape
    HF = w_vert.shape[0]
    F = HF // n_heads
    g = (vertex @ w_vert.T).reshape(B, N, n_heads, F)
    w_src = attn_w[0, :F]
    w_dst = attn_w[0, F:]
    s_src = jnp.einsum('bihf,f->bih', g, w_src)
    s_dst = jnp.einsum('bjhf,f->bjh', g, w_dst)
    e = s_src[:, :, None, :] + s_dst[:, None, :, :]        # [B, i, j, H]
    e = jnp.where(e > 0, e, slope * e)
    a = jax.nn.softmax(e, axis=2)                          # softmax over j (dim=-2)
    out = jnp.einsum('bijh,bjhf->bihf', a, g)
    if is_concat:
        return out.reshape(B, N, HF)
    return out.mean(axis=-1)


if __name__ == "__main__":
    # Module config: in_features=16, out_features=32, n_heads=4, is_concat=True
    #   -> n_hidden F = 8, linear_vert weight [32, 16], attn weight [1, 16]
    B, N, Din = 2, 8, 16
    n_heads, out_features = 4, 32
    F = out_features // n_heads
    slope = 0.2

    key = jax.random.PRNGKey(0)
    k_x, k_w, k_a, k_x2 = jax.random.split(key, 4)
    vertex = jax.random.normal(k_x, (B, N, Din), dtype=jnp.float32)
    w_vert = jax.random.normal(k_w, (n_heads * F, Din), dtype=jnp.float32) * 0.25
    attn_w = jax.random.normal(k_a, (1, 2 * F), dtype=jnp.float32) * 0.25

    ref = _reference(vertex, w_vert, attn_w, n_heads, True, slope)

    # 1) exact path (f32 MXU operands, exact reciprocal) — validates the algorithm.
    out_f32 = jax.block_until_ready(
        gat_layer_batch(vertex, w_vert, attn_w, n_heads=n_heads, is_concat=True,
                        negative_slope=slope, use_bf16_mxu=False))
    assert out_f32.shape == (B, N, n_heads * F)
    assert jnp.allclose(out_f32, ref, atol=1e-4, rtol=1e-4), "f32 path mismatch"

    # 2) perf path (bf16 MXU operands + approx reciprocal) — looser tolerance is a
    #    documented precision trade-off of the bf16 fast path, not a bug.
    out_bf16 = jax.block_until_ready(
        gat_layer_batch(vertex, w_vert, attn_w, n_heads=n_heads, is_concat=True,
                        negative_slope=slope, use_bf16_mxu=True))
    assert out_bf16.shape == (B, N, n_heads * F)
    assert jnp.allclose(out_bf16, ref, atol=5e-2, rtol=5e-2), "bf16 path mismatch"

    # 3) exercise the flash i/j tiling (multiple j tiles => online-softmax carry).
    B2, N2 = 1, 64
    vertex2 = jax.random.normal(k_x2, (B2, N2, Din), dtype=jnp.float32)
    out_tiled = jax.block_until_ready(
        gat_layer_batch(vertex2, w_vert, attn_w, n_heads=n_heads, is_concat=True,
                        negative_slope=slope, use_bf16_mxu=False,
                        ti_max=32, tj_max=16))
    ref2 = _reference(vertex2, w_vert, attn_w, n_heads, True, slope)
    assert jnp.allclose(out_tiled, ref2, atol=1e-4, rtol=1e-4), "tiled path mismatch"

    # 4) is_concat=False path (mean over the hidden dim, as the module does).
    out_nc = jax.block_until_ready(
        gat_layer_batch(vertex, w_vert, attn_w, n_heads=n_heads, is_concat=False,
                        negative_slope=slope, use_bf16_mxu=False))
    ref_nc = _reference(vertex, w_vert, attn_w, n_heads, False, slope)
    assert jnp.allclose(out_nc, ref_nc, atol=1e-4, rtol=1e-4), "non-concat mismatch"

    print("KERNEL_OK")
</pallas_src>

<mosaic_0001>
module attributes {stable_mosaic.version = 11 : i64} {
  func.func @_gat_flash_kernel(%arg0: i32, %arg1: i32, %arg2: i32, %arg3: memref<1x8x16xf32, #tpu.memory_space<vmem>>, %arg4: memref<1x8x16xf32, #tpu.memory_space<vmem>>, %arg5: memref<16x32xf32, #tpu.memory_space<vmem>>, %arg6: memref<32x128xf32, #tpu.memory_space<vmem>>, %arg7: memref<1x8x32xf32, #tpu.memory_space<vmem>>, %arg8: memref<4x8x1xf32, #tpu.memory_space<vmem>>, %arg9: memref<4x8x1xf32, #tpu.memory_space<vmem>>, %arg10: memref<4x8x8xf32, #tpu.memory_space<vmem>>) attributes {dimension_semantics = [#tpu.dimension_semantics<parallel>, #tpu.dimension_semantics<parallel>, #tpu.dimension_semantics<arbitrary>], iteration_bounds = array<i64: 2, 1, 1>, scalar_prefetch = 0 : i64, scratch_operands = 3 : i64, tpu.core_type = #tpu.core_type<tc>, window_params = [{transform_indices = @transform_0, window_bounds = array<i64: 1, 8, 16>}, {transform_indices = @transform_1, window_bounds = array<i64: 1, 8, 16>}, {pipeline_mode = #tpu.pipeline_mode<synchronous>, transform_indices = @transform_2, window_bounds = array<i64: 16, 32>}, {pipeline_mode = #tpu.pipeline_mode<synchronous>, transform_indices = @transform_3, window_bounds = array<i64: 32, 128>}, {transform_indices = @transform_4, window_bounds = array<i64: 1, 8, 32>}]} {
    %c0_i32 = arith.constant 0 : i32
    %0 = arith.cmpi eq, %arg2, %c0_i32 : i32
    %1 = arith.extui %0 : i1 to i32
    %c0_i32_0 = arith.constant 0 : i32
    %2 = arith.cmpi ne, %1, %c0_i32_0 : i32
    scf.if %2 {
      %cst_104 = arith.constant 0xFF800000 : f32
      %186 = vector.broadcast %cst_104 : f32 to vector<4x8x1xf32>
      %c0_105 = arith.constant 0 : index
      %c0_106 = arith.constant 0 : index
      %c0_107 = arith.constant 0 : index
      %187 = vector.load %arg8[%c0_105, %c0_106, %c0_107] : memref<4x8x1xf32, #tpu.memory_space<vmem>>, vector<4x8x1xf32>
      tpu.vector_store %arg8[%c0_105, %c0_106, %c0_107], %186 {strides = array<i32>} : memref<4x8x1xf32, #tpu.memory_space<vmem>>, vector<4x8x1xf32>,
      %cst_108 = arith.constant 0.000000e+00 : f32
      %188 = vector.broadcast %cst_108 : f32 to vector<4x8x1xf32>
      %c0_109 = arith.constant 0 : index
      %c0_110 = arith.constant 0 : index
      %c0_111 = arith.constant 0 : index
      %189 = vector.load %arg9[%c0_109, %c0_110, %c0_111] : memref<4x8x1xf32, #tpu.memory_space<vmem>>, vector<4x8x1xf32>
      tpu.vector_store %arg9[%c0_109, %c0_110, %c0_111], %188 {strides = array<i32>} : memref<4x8x1xf32, #tpu.memory_space<vmem>>, vector<4x8x1xf32>,
      %cst_112 = arith.constant 0.000000e+00 : f32
      %190 = vector.broadcast %cst_112 : f32 to vector<4x8x8xf32>
      %c0_113 = arith.constant 0 : index
      %c0_114 = arith.constant 0 : index
      %c0_115 = arith.constant 0 : index
      %191 = vector.load %arg10[%c0_113, %c0_114, %c0_115] : memref<4x8x8xf32, #tpu.memory_space<vmem>>, vector<4x8x8xf32>
      tpu.vector_store %arg10[%c0_113, %c0_114, %c0_115], %190 {strides = array<i32>} : memref<4x8x8xf32, #tpu.memory_space<vmem>>, vector<4x8x8xf32>,
    } else {
    }
    %c0 = arith.constant 0 : index
    %c0_1 = arith.constant 0 : index
    %3 = vector.load %arg5[%c0, %c0_1] : memref<16x32xf32, #tpu.memory_space<vmem>>, vector<16x32xf32>
    %c0_2 = arith.constant 0 : index
    %c0_3 = arith.constant 0 : index
    %4 = vector.load %arg6[%c0_2, %c0_3] : memref<32x128xf32, #tpu.memory_space<vmem>>, vector<32x128xf32>
    %c0_4 = arith.constant 0 : index
    %c0_5 = arith.constant 0 : index
    %c0_6 = arith.constant 0 : index
    %5 = vector.load %arg3[%c0_4, %c0_5, %c0_6] : memref<1x8x16xf32, #tpu.memory_space<vmem>>, vector<1x8x16xf32>
    %6 = vector.shape_cast %5 : vector<1x8x16xf32> to vector<8x16xf32>
    %cst = arith.constant dense<0.000000e+00> : vector<8x32xf32>
    %7 = tpu.matmul %6, %3, %cst {dimension_numbers = #tpu.dot_dimension_numbers<[1], [0], [0], [1], [0, 0, 1, 1], [], []>} : vector<8x16xf32>, vector<16x32xf32>, vector<8x32xf32> -> vector<8x32xf32>
    %c0_7 = arith.constant 0 : index
    %c0_8 = arith.constant 0 : index
    %c0_9 = arith.constant 0 : index
    %8 = vector.load %arg4[%c0_7, %c0_8, %c0_9] : memref<1x8x16xf32, #tpu.memory_space<vmem>>, vector<1x8x16xf32>
    %9 = vector.shape_cast %8 : vector<1x8x16xf32> to vector<8x16xf32>
    %cst_10 = arith.constant dense<0.000000e+00> : vector<8x32xf32>
    %10 = tpu.matmul %9, %3, %cst_10 {dimension_numbers = #tpu.dot_dimension_numbers<[1], [0], [0], [1], [0, 0, 1, 1], [], []>} : vector<8x16xf32>, vector<16x32xf32>, vector<8x32xf32> -> vector<8x32xf32>
    %cst_11 = arith.constant dense<0.000000e+00> : vector<8x128xf32>
    %11 = tpu.matmul %7, %4, %cst_11 {dimension_numbers = #tpu.dot_dimension_numbers<[1], [0], [0], [1], [0, 0, 1, 1], [], []>} : vector<8x32xf32>, vector<32x128xf32>, vector<8x128xf32> -> vector<8x128xf32>
    %cst_12 = arith.constant dense<0.000000e+00> : vector<8x128xf32>
    %12 = tpu.matmul %10, %4, %cst_12 {dimension_numbers = #tpu.dot_dimension_numbers<[1], [0], [0], [1], [0, 0, 1, 1], [], []>} : vector<8x32xf32>, vector<32x128xf32>, vector<8x128xf32> -> vector<8x128xf32>
    %13 = vector.extract_strided_slice %12 {offsets = [0, 4], sizes = [8, 4], strides = [1, 1]} : vector<8x128xf32> to vector<8x4xf32>
    %14 = tpu.transpose %13, [1, 0] : vector<8x4xf32> -> vector<4x8xf32>
    %15 = vector.extract_strided_slice %11 {offsets = [0, 0], sizes = [8, 1], strides = [1, 1]} : vector<8x128xf32> to vector<8x1xf32>
    %16 = vector.extract_strided_slice %14 {offsets = [0, 0], sizes = [1, 8], strides = [1, 1]} : vector<4x8xf32> to vector<1x8xf32>
    %17 = vector.broadcast %15 : vector<8x1xf32> to vector<8x8xf32>
    %18 = vector.broadcast %16 : vector<1x8xf32> to vector<8x8xf32>
    %19 = arith.addf %17, %18 : vector<8x8xf32>
    %cst_13 = arith.constant 0.000000e+00 : f32
    %20 = vector.broadcast %cst_13 : f32 to vector<8x8xf32>
    %21 = arith.cmpf ogt, %19, %20 : vector<8x8xf32>
    %cst_14 = arith.constant 2.000000e-01 : f32
    %22 = vector.broadcast %cst_14 : f32 to vector<8x8xf32>
    %23 = arith.mulf %22, %19 : vector<8x8xf32>
    %24 = arith.select %21, %19, %23 : vector<8x8xi1>, vector<8x8xf32>
    %c0_15 = arith.constant 0 : index
    %c0_16 = arith.constant 0 : index
    %c0_17 = arith.constant 0 : index
    %25 = vector.load %arg8[%c0_15, %c0_16, %c0_17] : memref<4x8x1xf32, #tpu.memory_space<vmem>>, vector<1x8x1xf32>
    %26 = vector.shape_cast %25 : vector<1x8x1xf32> to vector<8x1xf32>
    %cst_18 = arith.constant dense<0xFF800000> : vector<8xf32>
    %27 = vector.multi_reduction <maximumf>, %24, %cst_18 [1] : vector<8x8xf32> to vector<8xf32>
    %28 = vector.shape_cast %27 : vector<8xf32> to vector<8x1xf32>
    %29 = arith.maximumf %26, %28 : vector<8x1xf32>
    %30 = arith.subf %26, %29 : vector<8x1xf32>
    %31 = math.exp %30 : vector<8x1xf32>
    %32 = vector.broadcast %29 : vector<8x1xf32> to vector<8x8xf32>
    %33 = arith.subf %24, %32 : vector<8x8xf32>
    %34 = math.exp %33 : vector<8x8xf32>
    %c0_19 = arith.constant 0 : index
    %c0_20 = arith.constant 0 : index
    %c0_21 = arith.constant 0 : index
    %35 = vector.load %arg9[%c0_19, %c0_20, %c0_21] : memref<4x8x1xf32, #tpu.memory_space<vmem>>, vector<1x8x1xf32>
    %36 = vector.shape_cast %35 : vector<1x8x1xf32> to vector<8x1xf32>
    %37 = arith.mulf %31, %36 : vector<8x1xf32>
    %cst_22 = arith.constant dense<0.000000e+00> : vector<8xf32>
    %38 = vector.multi_reduction <add>, %34, %cst_22 [1] : vector<8x8xf32> to vector<8xf32>
    %39 = vector.shape_cast %38 : vector<8xf32> to vector<8x1xf32>
    %40 = arith.addf %37, %39 : vector<8x1xf32>
    %c0_23 = arith.constant 0 : index
    %c0_24 = arith.constant 0 : index
    %c0_25 = arith.constant 0 : index
    %41 = vector.load %arg9[%c0_23, %c0_24, %c0_25] : memref<4x8x1xf32, #tpu.memory_space<vmem>>, vector<1x8x1xf32>
    %42 = vector.shape_cast %41 : vector<1x8x1xf32> to vector<8x1xf32>
    %43 = vector.shape_cast %40 : vector<8x1xf32> to vector<1x8x1xf32>
    tpu.vector_store %arg9[%c0_23, %c0_24, %c0_25], %43 {strides = array<i32>} : memref<4x8x1xf32, #tpu.memory_space<vmem>>, vector<1x8x1xf32>,
    %c0_26 = arith.constant 0 : index
    %c0_27 = arith.constant 0 : index
    %c0_28 = arith.constant 0 : index
    %44 = vector.load %arg10[%c0_26, %c0_27, %c0_28] : memref<4x8x8xf32, #tpu.memory_space<vmem>>, vector<1x8x8xf32>
    %45 = vector.shape_cast %44 : vector<1x8x8xf32> to vector<8x8xf32>
    %46 = vector.broadcast %31 : vector<8x1xf32> to vector<8x8xf32>
    %47 = arith.mulf %46, %45 : vector<8x8xf32>
    %48 = vector.extract_strided_slice %10 {offsets = [0, 0], sizes = [8, 8], strides = [1, 1]} : vector<8x32xf32> to vector<8x8xf32>
    %cst_29 = arith.constant dense<0.000000e+00> : vector<8x8xf32>
    %49 = tpu.matmul %34, %48, %cst_29 {dimension_numbers = #tpu.dot_dimension_numbers<[1], [0], [0], [1], [0, 0, 1, 1], [], []>} : vector<8x8xf32>, vector<8x8xf32>, vector<8x8xf32> -> vector<8x8xf32>
    %50 = arith.addf %47, %49 : vector<8x8xf32>
    %c0_30 = arith.constant 0 : index
    %c0_31 = arith.constant 0 : index
    %c0_32 = arith.constant 0 : index
    %51 = vector.load %arg10[%c0_30, %c0_31, %c0_32] : memref<4x8x8xf32, #tpu.memory_space<vmem>>, vector<1x8x8xf32>
    %52 = vector.shape_cast %51 : vector<1x8x8xf32> to vector<8x8xf32>
    %53 = vector.shape_cast %50 : vector<8x8xf32> to vector<1x8x8xf32>
    tpu.vector_store %arg10[%c0_30, %c0_31, %c0_32], %53 {strides = array<i32>} : memref<4x8x8xf32, #tpu.memory_space<vmem>>, vector<1x8x8xf32>,
    %c0_33 = arith.constant 0 : index
    %c0_34 = arith.constant 0 : index
    %c0_35 = arith.constant 0 : index
    %54 = vector.load %arg8[%c0_33, %c0_34, %c0_35] : memref<4x8x1xf32, #tpu.memory_space<vmem>>, vector<1x8x1xf32>
    %55 = vector.shape_cast %54 : vector<1x8x1xf32> to vector<8x1xf32>
    %56 = vector.shape_cast %29 : vector<8x1xf32> to vector<1x8x1xf32>
    tpu.vector_store %arg8[%c0_33, %c0_34, %c0_35], %56 {strides = array<i32>} : memref<4x8x1xf32, #tpu.memory_space<vmem>>, vector<1x8x1xf32>,
    %57 = vector.extract_strided_slice %11 {offsets = [0, 1], sizes = [8, 1], strides = [1, 1]} : vector<8x128xf32> to vector<8x1xf32>
    %58 = vector.extract_strided_slice %14 {offsets = [1, 0], sizes = [1, 8], strides = [1, 1]} : vector<4x8xf32> to vector<1x8xf32>
    %59 = vector.broadcast %57 : vector<8x1xf32> to vector<8x8xf32>
    %60 = vector.broadcast %58 : vector<1x8xf32> to vector<8x8xf32>
    %61 = arith.addf %59, %60 : vector<8x8xf32>
    %cst_36 = arith.constant 0.000000e+00 : f32
    %62 = vector.broadcast %cst_36 : f32 to vector<8x8xf32>
    %63 = arith.cmpf ogt, %61, %62 : vector<8x8xf32>
    %cst_37 = arith.constant 2.000000e-01 : f32
    %64 = vector.broadcast %cst_37 : f32 to vector<8x8xf32>
    %65 = arith.mulf %64, %61 : vector<8x8xf32>
    %66 = arith.select %63, %61, %65 : vector<8x8xi1>, vector<8x8xf32>
    %c1 = arith.constant 1 : index
    %c0_38 = arith.constant 0 : index
    %c0_39 = arith.constant 0 : index
    %67 = vector.load %arg8[%c1, %c0_38, %c0_39] : memref<4x8x1xf32, #tpu.memory_space<vmem>>, vector<1x8x1xf32>
    %68 = vector.shape_cast %67 : vector<1x8x1xf32> to vector<8x1xf32>
    %cst_40 = arith.constant dense<0xFF800000> : vector<8xf32>
    %69 = vector.multi_reduction <maximumf>, %66, %cst_40 [1] : vector<8x8xf32> to vector<8xf32>
    %70 = vector.shape_cast %69 : vector<8xf32> to vector<8x1xf32>
    %71 = arith.maximumf %68, %70 : vector<8x1xf32>
    %72 = arith.subf %68, %71 : vector<8x1xf32>
    %73 = math.exp %72 : vector<8x1xf32>
    %74 = vector.broadcast %71 : vector<8x1xf32> to vector<8x8xf32>
    %75 = arith.subf %66, %74 : vector<8x8xf32>
    %76 = math.exp %75 : vector<8x8xf32>
    %c1_41 = arith.constant 1 : index
    %c0_42 = arith.constant 0 : index
    %c0_43 = arith.constant 0 : index
    %77 = vector.load %arg9[%c1_41, %c0_42, %c0_43] : memref<4x8x1xf32, #tpu.memory_space<vmem>>, vector<1x8x1xf32>
    %78 = vector.shape_cast %77 : vector<1x8x1xf32> to vector<8x1xf32>
    %79 = arith.mulf %73, %78 : vector<8x1xf32>
    %cst_44 = arith.constant dense<0.000000e+00> : vector<8xf32>
    %80 = vector.multi_reduction <add>, %76, %cst_44 [1] : vector<8x8xf32> to vector<8xf32>
    %81 = vector.shape_cast %80 : vector<8xf32> to vector<8x1xf32>
    %82 = arith.addf %79, %81 : vector<8x1xf32>
    %c1_45 = arith.constant 1 : index
    %c0_46 = arith.constant 0 : index
    %c0_47 = arith.constant 0 : index
    %83 = vector.load %arg9[%c1_45, %c0_46, %c0_47] : memref<4x8x1xf32, #tpu.memory_space<vmem>>, vector<1x8x1xf32>
    %84 = vector.shape_cast %83 : vector<1x8x1xf32> to vector<8x1xf32>
    %85 = vector.shape_cast %82 : vector<8x1xf32> to vector<1x8x1xf32>
    tpu.vector_store %arg9[%c1_45, %c0_46, %c0_47], %85 {strides = array<i32>} : memref<4x8x1xf32, #tpu.memory_space<vmem>>, vector<1x8x1xf32>,
    %c1_48 = arith.constant 1 : index
    %c0_49 = arith.constant 0 : index
    %c0_50 = arith.constant 0 : index
    %86 = vector.load %arg10[%c1_48, %c0_49, %c0_50] : memref<4x8x8xf32, #tpu.memory_space<vmem>>, vector<1x8x8xf32>
    %87 = vector.shape_cast %86 : vector<1x8x8xf32> to vector<8x8xf32>
    %88 = vector.broadcast %73 : vector<8x1xf32> to vector<8x8xf32>
    %89 = arith.mulf %88, %87 : vector<8x8xf32>
    %90 = vector.extract_strided_slice %10 {offsets = [0, 8], sizes = [8, 8], strides = [1, 1]} : vector<8x32xf32> to vector<8x8xf32>
    %cst_51 = arith.constant dense<0.000000e+00> : vector<8x8xf32>
    %91 = tpu.matmul %76, %90, %cst_51 {dimension_numbers = #tpu.dot_dimension_numbers<[1], [0], [0], [1], [0, 0, 1, 1], [], []>} : vector<8x8xf32>, vector<8x8xf32>, vector<8x8xf32> -> vector<8x8xf32>
    %92 = arith.addf %89, %91 : vector<8x8xf32>
    %c1_52 = arith.constant 1 : index
    %c0_53 = arith.constant 0 : index
    %c0_54 = arith.constant 0 : index
    %93 = vector.load %arg10[%c1_52, %c0_53, %c0_54] : memref<4x8x8xf32, #tpu.memory_space<vmem>>, vector<1x8x8xf32>
    %94 = vector.shape_cast %93 : vector<1x8x8xf32> to vector<8x8xf32>
    %95 = vector.shape_cast %92 : vector<8x8xf32> to vector<1x8x8xf32>
    tpu.vector_store %arg10[%c1_52, %c0_53, %c0_54], %95 {strides = array<i32>} : memref<4x8x8xf32, #tpu.memory_space<vmem>>, vector<1x8x8xf32>,
    %c1_55 = arith.constant 1 : index
    %c0_56 = arith.constant 0 : index
    %c0_57 = arith.constant 0 : index
    %96 = vector.load %arg8[%c1_55, %c0_56, %c0_57] : memref<4x8x1xf32, #tpu.memory_space<vmem>>, vector<1x8x1xf32>
    %97 = vector.shape_cast %96 : vector<1x8x1xf32> to vector<8x1xf32>
    %98 = vector.shape_cast %71 : vector<8x1xf32> to vector<1x8x1xf32>
    tpu.vector_store %arg8[%c1_55, %c0_56, %c0_57], %98 {strides = array<i32>} : memref<4x8x1xf32, #tpu.memory_space<vmem>>, vector<1x8x1xf32>,
    %99 = vector.extract_strided_slice %11 {offsets = [0, 2], sizes = [8, 1], strides = [1, 1]} : vector<8x128xf32> to vector<8x1xf32>
    %100 = vector.extract_strided_slice %14 {offsets = [2, 0], sizes = [1, 8], strides = [1, 1]} : vector<4x8xf32> to vector<1x8xf32>
    %101 = vector.broadcast %99 : vector<8x1xf32> to vector<8x8xf32>
    %102 = vector.broadcast %100 : vector<1x8xf32> to vector<8x8xf32>
    %103 = arith.addf %101, %102 : vector<8x8xf32>
    %cst_58 = arith.constant 0.000000e+00 : f32
    %104 = vector.broadcast %cst_58 : f32 to vector<8x8xf32>
    %105 = arith.cmpf ogt, %103, %104 : vector<8x8xf32>
    %cst_59 = arith.constant 2.000000e-01 : f32
    %106 = vector.broadcast %cst_59 : f32 to vector<8x8xf32>
    %107 = arith.mulf %106, %103 : vector<8x8xf32>
    %108 = arith.select %105, %103, %107 : vector<8x8xi1>, vector<8x8xf32>
    %c2 = arith.constant 2 : index
    %c0_60 = arith.constant 0 : index
    %c0_61 = arith.constant 0 : index
    %109 = vector.load %arg8[%c2, %c0_60, %c0_61] : memref<4x8x1xf32, #tpu.memory_space<vmem>>, vector<1x8x1xf32>
    %110 = vector.shape_cast %109 : vector<1x8x1xf32> to vector<8x1xf32>
    %cst_62 = arith.constant dense<0xFF800000> : vector<8xf32>
    %111 = vector.multi_reduction <maximumf>, %108, %cst_62 [1] : vector<8x8xf32> to vector<8xf32>
    %112 = vector.shape_cast %111 : vector<8xf32> to vector<8x1xf32>
    %113 = arith.maximumf %110, %112 : vector<8x1xf32>
    %114 = arith.subf %110, %113 : vector<8x1xf32>
    %115 = math.exp %114 : vector<8x1xf32>
    %116 = vector.broadcast %113 : vector<8x1xf32> to vector<8x8xf32>
    %117 = arith.subf %108, %116 : vector<8x8xf32>
    %118 = math.exp %117 : vector<8x8xf32>
    %c2_63 = arith.constant 2 : index
    %c0_64 = arith.constant 0 : index
    %c0_65 = arith.constant 0 : index
    %119 = vector.load %arg9[%c2_63, %c0_64, %c0_65] : memref<4x8x1xf32, #tpu.memory_space<vmem>>, vector<1x8x1xf32>
    %120 = vector.shape_cast %119 : vector<1x8x1xf32> to vector<8x1xf32>
    %121 = arith.mulf %115, %120 : vector<8x1xf32>
    %cst_66 = arith.constant dense<0.000000e+00> : vector<8xf32>
    %122 = vector.multi_reduction <add>, %118, %cst_66 [1] : vector<8x8xf32> to vector<8xf32>
    %123 = vector.shape_cast %122 : vector<8xf32> to vector<8x1xf32>
    %124 = arith.addf %121, %123 : vector<8x1xf32>
    %c2_67 = arith.constant 2 : index
    %c0_68 = arith.constant 0 : index
    %c0_69 = arith.constant 0 : index
    %125 = vector.load %arg9[%c2_67, %c0_68, %c0_69] : memref<4x8x1xf32, #tpu.memory_space<vmem>>, vector<1x8x1xf32>
    %126 = vector.shape_cast %125 : vector<1x8x1xf32> to vector<8x1xf32>
    %127 = vector.shape_cast %124 : vector<8x1xf32> to vector<1x8x1xf32>
    tpu.vector_store %arg9[%c2_67, %c0_68, %c0_69], %127 {strides = array<i32>} : memref<4x8x1xf32, #tpu.memory_space<vmem>>, vector<1x8x1xf32>,
    %c2_70 = arith.constant 2 : index
    %c0_71 = arith.constant 0 : index
    %c0_72 = arith.constant 0 : index
    %128 = vector.load %arg10[%c2_70, %c0_71, %c0_72] : memref<4x8x8xf32, #tpu.memory_space<vmem>>, vector<1x8x8xf32>
    %129 = vector.shape_cast %128 : vector<1x8x8xf32> to vector<8x8xf32>
    %130 = vector.broadcast %115 : vector<8x1xf32> to vector<8x8xf32>
    %131 = arith.mulf %130, %129 : vector<8x8xf32>
    %132 = vector.extract_strided_slice %10 {offsets = [0, 16], sizes = [8, 8], strides = [1, 1]} : vector<8x32xf32> to vector<8x8xf32>
    %cst_73 = arith.constant dense<0.000000e+00> : vector<8x8xf32>
    %133 = tpu.matmul %118, %132, %cst_73 {dimension_numbers = #tpu.dot_dimension_numbers<[1], [0], [0], [1], [0, 0, 1, 1], [], []>} : vector<8x8xf32>, vector<8x8xf32>, vector<8x8xf32> -> vector<8x8xf32>
    %134 = arith.addf %131, %133 : vector<8x8xf32>
    %c2_74 = arith.constant 2 : index
    %c0_75 = arith.constant 0 : index
    %c0_76 = arith.constant 0 : index
    %135 = vector.load %arg10[%c2_74, %c0_75, %c0_76] : memref<4x8x8xf32, #tpu.memory_space<vmem>>, vector<1x8x8xf32>
    %136 = vector.shape_cast %135 : vector<1x8x8xf32> to vector<8x8xf32>
    %137 = vector.shape_cast %134 : vector<8x8xf32> to vector<1x8x8xf32>
    tpu.vector_store %arg10[%c2_74, %c0_75, %c0_76], %137 {strides = array<i32>} : memref<4x8x8xf32, #tpu.memory_space<vmem>>, vector<1x8x8xf32>,
    %c2_77 = arith.constant 2 : index
    %c0_78 = arith.constant 0 : index
    %c0_79 = arith.constant 0 : index
    %138 = vector.load %arg8[%c2_77, %c0_78, %c0_79] : memref<4x8x1xf32, #tpu.memory_space<vmem>>, vector<1x8x1xf32>
    %139 = vector.shape_cast %138 : vector<1x8x1xf32> to vector<8x1xf32>
    %140 = vector.shape_cast %113 : vector<8x1xf32> to vector<1x8x1xf32>
    tpu.vector_store %arg8[%c2_77, %c0_78, %c0_79], %140 {strides = array<i32>} : memref<4x8x1xf32, #tpu.memory_space<vmem>>, vector<1x8x1xf32>,
    %141 = vector.extract_strided_slice %11 {offsets = [0, 3], sizes = [8, 1], strides = [1, 1]} : vector<8x128xf32> to vector<8x1xf32>
    %142 = vector.extract_strided_slice %14 {offsets = [3, 0], sizes = [1, 8], strides = [1, 1]} : vector<4x8xf32> to vector<1x8xf32>
    %143 = vector.broadcast %141 : vector<8x1xf32> to vector<8x8xf32>
    %144 = vector.broadcast %142 : vector<1x8xf32> to vector<8x8xf32>
    %145 = arith.addf %143, %144 : vector<8x8xf32>
    %cst_80 = arith.constant 0.000000e+00 : f32
    %146 = vector.broadcast %cst_80 : f32 to vector<8x8xf32>
    %147 = arith.cmpf ogt, %145, %146 : vector<8x8xf32>
    %cst_81 = arith.constant 2.000000e-01 : f32
    %148 = vector.broadcast %cst_81 : f32 to vector<8x8xf32>
    %149 = arith.mulf %148, %145 : vector<8x8xf32>
    %150 = arith.select %147, %145, %149 : vector<8x8xi1>, vector<8x8xf32>
    %c3 = arith.constant 3 : index
    %c0_82 = arith.constant 0 : index
    %c0_83 = arith.constant 0 : index
    %151 = vector.load %arg8[%c3, %c0_82, %c0_83] : memref<4x8x1xf32, #tpu.memory_space<vmem>>, vector<1x8x1xf32>
    %152 = vector.shape_cast %151 : vector<1x8x1xf32> to vector<8x1xf32>
    %cst_84 = arith.constant dense<0xFF800000> : vector<8xf32>
    %153 = vector.multi_reduction <maximumf>, %150, %cst_84 [1] : vector<8x8xf32> to vector<8xf32>
    %154 = vector.shape_cast %153 : vector<8xf32> to vector<8x1xf32>
    %155 = arith.maximumf %152, %154 : vector<8x1xf32>
    %156 = arith.subf %152, %155 : vector<8x1xf32>
    %157 = math.exp %156 : vector<8x1xf32>
    %158 = vector.broadcast %155 : vector<8x1xf32> to vector<8x8xf32>
    %159 = arith.subf %150, %158 : vector<8x8xf32>
    %160 = math.exp %159 : vector<8x8xf32>
    %c3_85 = arith.constant 3 : index
    %c0_86 = arith.constant 0 : index
    %c0_87 = arith.constant 0 : index
    %161 = vector.load %arg9[%c3_85, %c0_86, %c0_87] : memref<4x8x1xf32, #tpu.memory_space<vmem>>, vector<1x8x1xf32>
    %162 = vector.shape_cast %161 : vector<1x8x1xf32> to vector<8x1xf32>
    %163 = arith.mulf %157, %162 : vector<8x1xf32>
    %cst_88 = arith.constant dense<0.000000e+00> : vector<8xf32>
    %164 = vector.multi_reduction <add>, %160, %cst_88 [1] : vector<8x8xf32> to vector<8xf32>
    %165 = vector.shape_cast %164 : vector<8xf32> to vector<8x1xf32>
    %166 = arith.addf %163, %165 : vector<8x1xf32>
    %c3_89 = arith.constant 3 : index
    %c0_90 = arith.constant 0 : index
    %c0_91 = arith.constant 0 : index
    %167 = vector.load %arg9[%c3_89, %c0_90, %c0_91] : memref<4x8x1xf32, #tpu.memory_space<vmem>>, vector<1x8x1xf32>
    %168 = vector.shape_cast %167 : vector<1x8x1xf32> to vector<8x1xf32>
    %169 = vector.shape_cast %166 : vector<8x1xf32> to vector<1x8x1xf32>
    tpu.vector_store %arg9[%c3_89, %c0_90, %c0_91], %169 {strides = array<i32>} : memref<4x8x1xf32, #tpu.memory_space<vmem>>, vector<1x8x1xf32>,
    %c3_92 = arith.constant 3 : index
    %c0_93 = arith.constant 0 : index
    %c0_94 = arith.constant 0 : index
    %170 = vector.load %arg10[%c3_92, %c0_93, %c0_94] : memref<4x8x8xf32, #tpu.memory_space<vmem>>, vector<1x8x8xf32>
    %171 = vector.shape_cast %170 : vector<1x8x8xf32> to vector<8x8xf32>
    %172 = vector.broadcast %157 : vector<8x1xf32> to vector<8x8xf32>
    %173 = arith.mulf %172, %171 : vector<8x8xf32>
    %174 = vector.extract_strided_slice %10 {offsets = [0, 24], sizes = [8, 8], strides = [1, 1]} : vector<8x32xf32> to vector<8x8xf32>
    %cst_95 = arith.constant dense<0.000000e+00> : vector<8x8xf32>
    %175 = tpu.matmul %160, %174, %cst_95 {dimension_numbers = #tpu.dot_dimension_numbers<[1], [0], [0], [1], [0, 0, 1, 1], [], []>} : vector<8x8xf32>, vector<8x8xf32>, vector<8x8xf32> -> vector<8x8xf32>
    %176 = arith.addf %173, %175 : vector<8x8xf32>
    %c3_96 = arith.constant 3 : index
    %c0_97 = arith.constant 0 : index
    %c0_98 = arith.constant 0 : index
    %177 = vector.load %arg10[%c3_96, %c0_97, %c0_98] : memref<4x8x8xf32, #tpu.memory_space<vmem>>, vector<1x8x8xf32>
    %178 = vector.shape_cast %177 : vector<1x8x8xf32> to vector<8x8xf32>
    %179 = vector.shape_cast %176 : vector<8x8xf32> to vector<1x8x8xf32>
    tpu.vector_store %arg10[%c3_96, %c0_97, %c0_98], %179 {strides = array<i32>} : memref<4x8x8xf32, #tpu.memory_space<vmem>>, vector<1x8x8xf32>,
    %c3_99 = arith.constant 3 : index
    %c0_100 = arith.constant 0 : index
    %c0_101 = arith.constant 0 : index
    %180 = vector.load %arg8[%c3_99, %c0_100, %c0_101] : memref<4x8x1xf32, #tpu.memory_space<vmem>>, vector<1x8x1xf32>
    %181 = vector.shape_cast %180 : vector<1x8x1xf32> to vector<8x1xf32>
    %182 = vector.shape_cast %155 : vector<8x1xf32> to vector<1x8x1xf32>
    tpu.vector_store %arg8[%c3_99, %c0_100, %c0_101], %182 {strides = array<i32>} : memref<4x8x1xf32, #tpu.memory_space<vmem>>, vector<1x8x1xf32>,
    %c0_i32_102 = arith.constant 0 : i32
    %183 = arith.cmpi eq, %arg2, %c0_i32_102 : i32
    %184 = arith.extui %183 : i1 to i32
    %c0_i32_103 = arith.constant 0 : i32
    %185 = arith.cmpi ne, %184, %c0_i32_103 : i32
    scf.if %185 {
      %c0_104 = arith.constant 0 : index
      %c0_105 = arith.constant 0 : index
      %c0_106 = arith.constant 0 : index
      %186 = vector.load %arg9[%c0_104, %c0_105, %c0_106] : memref<4x8x1xf32, #tpu.memory_space<vmem>>, vector<1x8x1xf32>
      %187 = vector.shape_cast %186 : vector<1x8x1xf32> to vector<8x1xf32>
      %188 = tpu.reciprocal %187 : vector<8x1xf32> -> vector<8x1xf32>
      %c0_107 = arith.constant 0 : index
      %c0_108 = arith.constant 0 : index
      %c0_109 = arith.constant 0 : index
      %189 = vector.load %arg10[%c0_107, %c0_108, %c0_109] : memref<4x8x8xf32, #tpu.memory_space<vmem>>, vector<1x8x8xf32>
      %190 = vector.shape_cast %189 : vector<1x8x8xf32> to vector<8x8xf32>
      %191 = vector.broadcast %188 : vector<8x1xf32> to vector<8x8xf32>
      %192 = arith.mulf %190, %191 : vector<8x8xf32>
      %c0_110 = arith.constant 0 : index
      %c0_111 = arith.constant 0 : index
      %c0_112 = arith.constant 0 : index
      %193 = vector.load %arg7[%c0_110, %c0_111, %c0_112] : memref<1x8x32xf32, #tpu.memory_space<vmem>>, vector<1x8x8xf32>
      %194 = vector.shape_cast %193 : vector<1x8x8xf32> to vector<8x8xf32>
      %195 = vector.shape_cast %192 : vector<8x8xf32> to vector<1x8x8xf32>
      tpu.vector_store %arg7[%c0_110, %c0_111, %c0_112], %195 {strides = array<i32>} : memref<1x8x32xf32, #tpu.memory_space<vmem>>, vector<1x8x8xf32>,
      %c1_113 = arith.constant 1 : index
      %c0_114 = arith.constant 0 : index
      %c0_115 = arith.constant 0 : index
      %196 = vector.load %arg9[%c1_113, %c0_114, %c0_115] : memref<4x8x1xf32, #tpu.memory_space<vmem>>, vector<1x8x1xf32>
      %197 = vector.shape_cast %196 : vector<1x8x1xf32> to vector<8x1xf32>
      %198 = tpu.reciprocal %197 : vector<8x1xf32> -> vector<8x1xf32>
      %c1_116 = arith.constant 1 : index
      %c0_117 = arith.constant 0 : index
      %c0_118 = arith.constant 0 : index
      %199 = vector.load %arg10[%c1_116, %c0_117, %c0_118] : memref<4x8x8xf32, #tpu.memory_space<vmem>>, vector<1x8x8xf32>
      %200 = vector.shape_cast %199 : vector<1x8x8xf32> to vector<8x8xf32>
      %201 = vector.broadcast %198 : vector<8x1xf32> to vector<8x8xf32>
      %202 = arith.mulf %200, %201 : vector<8x8xf32>
      %c0_119 = arith.constant 0 : index
      %c0_120 = arith.constant 0 : index
      %c8 = arith.constant 8 : index
      %203 = vector.load %arg7[%c0_119, %c0_120, %c8] : memref<1x8x32xf32, #tpu.memory_space<vmem>>, vector<1x8x8xf32>
      %204 = vector.shape_cast %203 : vector<1x8x8xf32> to vector<8x8xf32>
      %205 = vector.shape_cast %202 : vector<8x8xf32> to vector<1x8x8xf32>
      tpu.vector_store %arg7[%c0_119, %c0_120, %c8], %205 {strides = array<i32>} : memref<1x8x32xf32, #tpu.memory_space<vmem>>, vector<1x8x8xf32>,
      %c2_121 = arith.constant 2 : index
      %c0_122 = arith.constant 0 : index
      %c0_123 = arith.constant 0 : index
      %206 = vector.load %arg9[%c2_121, %c0_122, %c0_123] : memref<4x8x1xf32, #tpu.memory_space<vmem>>, vector<1x8x1xf32>
      %207 = vector.shape_cast %206 : vector<1x8x1xf32> to vector<8x1xf32>
      %208 = tpu.reciprocal %207 : vector<8x1xf32> -> vector<8x1xf32>
      %c2_124 = arith.constant 2 : index
      %c0_125 = arith.constant 0 : index
      %c0_126 = arith.constant 0 : index
      %209 = vector.load %arg10[%c2_124, %c0_125, %c0_126] : memref<4x8x8xf32, #tpu.memory_space<vmem>>, vector<1x8x8xf32>
      %210 = vector.shape_cast %209 : vector<1x8x8xf32> to vector<8x8xf32>
      %211 = vector.broadcast %208 : vector<8x1xf32> to vector<8x8xf32>
      %212 = arith.mulf %210, %211 : vector<8x8xf32>
      %c0_127 = arith.constant 0 : index
      %c0_128 = arith.constant 0 : index
      %c16 = arith.constant 16 : index
      %213 = vector.load %arg7[%c0_127, %c0_128, %c16] : memref<1x8x32xf32, #tpu.memory_space<vmem>>, vector<1x8x8xf32>
      %214 = vector.shape_cast %213 : vector<1x8x8xf32> to vector<8x8xf32>
      %215 = vector.shape_cast %212 : vector<8x8xf32> to vector<1x8x8xf32>
      tpu.vector_store %arg7[%c0_127, %c0_128, %c16], %215 {strides = array<i32>} : memref<1x8x32xf32, #tpu.memory_space<vmem>>, vector<1x8x8xf32>,
      %c3_129 = arith.constant 3 : index
      %c0_130 = arith.constant 0 : index
      %c0_131 = arith.constant 0 : index
      %216 = vector.load %arg9[%c3_129, %c0_130, %c0_131] : memref<4x8x1xf32, #tpu.memory_space<vmem>>, vector<1x8x1xf32>
      %217 = vector.shape_cast %216 : vector<1x8x1xf32> to vector<8x1xf32>
      %218 = tpu.reciprocal %217 : vector<8x1xf32> -> vector<8x1xf32>
      %c3_132 = arith.constant 3 : index
      %c0_133 = arith.constant 0 : index
      %c0_134 = arith.constant 0 : index
      %219 = vector.load %arg10[%c3_132, %c0_133, %c0_134] : memref<4x8x8xf32, #tpu.memory_space<vmem>>, vector<1x8x8xf32>
      %220 = vector.shape_cast %219 : vector<1x8x8xf32> to vector<8x8xf32>
      %221 = vector.broadcast %218 : vector<8x1xf32> to vector<8x8xf32>
      %222 = arith.mulf %220, %221 : vector<8x8xf32>
      %c0_135 = arith.constant 0 : index
      %c0_136 = arith.constant 0 : index
      %c24 = arith.constant 24 : index
      %223 = vector.load %arg7[%c0_135, %c0_136, %c24] : memref<1x8x32xf32, #tpu.memory_space<vmem>>, vector<1x8x8xf32>
      %224 = vector.shape_cast %223 : vector<1x8x8xf32> to vector<8x8xf32>
      %225 = vector.shape_cast %222 : vector<8x8xf32> to vector<1x8x8xf32>
      tpu.vector_store %arg7[%c0_135, %c0_136, %c24], %225 {strides = array<i32>} : memref<1x8x32xf32, #tpu.memory_space<vmem>>, vector<1x8x8xf32>,
    } else {
    }
    return
  }
  func.func @transform_0(%arg0: i32, %arg1: i32, %arg2: i32) -> (i32, i32, i32) {
    %c0_i32 = arith.constant 0 : i32
    %c0_i32_0 = arith.constant 0 : i32
    return %arg0, %arg1, %c0_i32 : i32, i32, i32
  }
  func.func @transform_1(%arg0: i32, %arg1: i32, %arg2: i32) -> (i32, i32, i32) {
    %c0_i32 = arith.constant 0 : i32
    %c0_i32_0 = arith.constant 0 : i32
    return %arg0, %arg2, %c0_i32 : i32, i32, i32
  }
  func.func @transform_2(%arg0: i32, %arg1: i32, %arg2: i32) -> (i32, i32) {
    %c0_i32 = arith.constant 0 : i32
    %c0_i32_0 = arith.constant 0 : i32
    %c0_i32_1 = arith.constant 0 : i32
    return %c0_i32, %c0_i32_0 : i32, i32
  }
  func.func @transform_3(%arg0: i32, %arg1: i32, %arg2: i32) -> (i32, i32) {
    %c0_i32 = arith.constant 0 : i32
    %c0_i32_0 = arith.constant 0 : i32
    %c0_i32_1 = arith.constant 0 : i32
    return %c0_i32, %c0_i32_0 : i32, i32
  }
  func.func @transform_4(%arg0: i32, %arg1: i32, %arg2: i32) -> (i32, i32, i32) {
    %c0_i32 = arith.constant 0 : i32
    %c0_i32_0 = arith.constant 0 : i32
    return %arg0, %arg1, %c0_i32 : i32, i32, i32
  }
}

</mosaic_0001>

<llo_original>
// kernel: tpu_custom_call.1
$region0: #{tpu_custom_call.1}
  #allocation0 [shape = 'u32[]', space=smem, size = 0x4, offset = 0x4, fixed_abs, tag = 'smem constant byte address 0x4 - core index']
  #allocation1 [shape = 'u32[144,128]{1,0:T(1,128)}', space=vmem, size = 0x12000, scoped, tag = 'internal scratch']
  #allocation2 [shape = 'f32[4,8,1]{2,1,0:T(8,128)}', space=vmem, size = 0x4000, scoped, tag = 'scratch operand']
  #allocation3 [shape = 'f32[4,8,1]{2,1,0:T(8,128)}', space=vmem, size = 0x4000, scoped, tag = 'scratch operand']
  #allocation4 [shape = 'f32[4,8,8]{2,1,0:T(8,128)}', space=vmem, size = 0x4000, scoped, tag = 'scratch operand']
  %s0 = inlined_call_operand.hbm [shape: f32[2,8,16], index: 0, kind: input, shape index: {}]
  %s1 = inlined_call_operand.hbm [shape: f32[2,8,16], index: 1, kind: input, shape index: {}]
  %s2 = inlined_call_operand.hbm [shape: f32[16,32], index: 2, kind: input, shape index: {}]
  %s3 = inlined_call_operand.hbm [shape: f32[32,128], index: 3, kind: input, shape index: {}]
  %s4 = inlined_call_operand.hbm [shape: f32[2,8,32], index: 4, kind: output, shape index: {}]
  %s5 = sld [smem:[#allocation0]]
  $region73: #{tpu_custom_call.1} parent=0
    _
  %s7 = ssub.s32 1, %s5
  %s8 = scalar_select 0, %s7, %s5
  $region1: #{tpu_custom_call.1} parent=0
    #allocation5 [shape = 'u8[8192]{0}', space=vmem, size = 0x2000, scoped, tag = 'input window, operand 0']
    #allocation6 [shape = 's32[2]{0}', space=sflag, size = 0x8, scoped, tag = 'scoped memory for tpu_custom_call.1']
    #allocation7 [shape = 's32[2]{0}', space=sflag, size = 0x8, scoped, tag = 'scoped memory for tpu_custom_call.1']
    #allocation8 [shape = 'u8[8192]{0}', space=vmem, size = 0x2000, scoped, tag = 'input window, operand 1']
    #allocation9 [shape = 's32[2]{0}', space=sflag, size = 0x8, scoped, tag = 'scoped memory for tpu_custom_call.1']
    #allocation10 [shape = 'u8[8192]{0}', space=vmem, size = 0x2000, scoped, tag = 'input window, operand 2, single buffered']
    #allocation11 [shape = 'u8[16384]{0}', space=vmem, size = 0x4000, scoped, tag = 'input window, operand 3, single buffered']
    #allocation12 [shape = 's32[1]{0}', space=sflag, size = 0x4, scoped, tag = 'scoped memory for tpu_custom_call.1']
    #allocation13 [shape = 'u8[8192]{0}', space=vmem, size = 0x2000, scoped, tag = 'output window, operand 0']
    %9 = vsyncpa [#allocation6], 0
    %s10 = scalar_lea.sflag [#allocation6], 1
    %11 = vsyncpa %s10, 0
    %12 = vsyncpa [#allocation9], 0
    %s13 = scalar_lea.sflag [#allocation9], 1
    %14 = vsyncpa %s13, 0
    %15 = vsyncpa [#allocation12], 0
    %16 = vsyncpa [#allocation7], 0
    %s17 = scalar_lea.sflag [#allocation7], 1
    %18 = vsyncpa %s17, 0
    loop: start=0, step=1, limit=4
    $region2: #{tpu_custom_call.1} parent=1 // loop_pre_header
      _
    $region3: #{tpu_custom_call.1} parent=1 // loop_header
      %s20 = sphi 0, %s24
      %p21 = scmp.ge.s32.totalorder %s20, 4
      %s27 = sphi 0, %s46
      %s28 = sphi 0, %s42
      %s29 = sphi 0, %s38
      %s30 = sphi 0, %s27
      %s31 = sphi 0, %s28
      %s32 = sphi 0, %s29
      %s33 = sphi 0, %s30
      %s34 = sphi 0, %s31
      %s35 = sphi 0, %s32
      %s51 = sphi 0, %s53
      %s54 = sphi 0, %s51
      %s55 = sphi 0, %s54
      %s71 = sphi 0, %s55
      %s79 = sphi 0, %s81
      %s82 = sphi 0, %s79
      %s83 = sphi 0, %s82
      %s99 = sphi 0, %s83
      %s103 = sphi 0, %s103
      %s105 = sphi 0, %s103
      %s106 = sphi 0, %s105
      %s120 = sphi 0, %s106
      %s124 = sphi 0, %s124
      %s126 = sphi 0, %s124
      %s127 = sphi 0, %s126
      %s141 = sphi 0, %s127
      %s149 = sphi 0, %s151
      %s152 = sphi 0, %s149
      %s153 = sphi 0, %s152
      %s169 = sphi 0, %s153
    $region4: #{tpu_custom_call.1} parent=1 // loop_header_branch
      %23 = sbr.rel (%p21) target = $region8
    $region5: #{tpu_custom_call.1} parent=1 // loop_body
      %s25 = ssub.s32 %s20, 1
      %s26 = ssub.s32 %s20, 2
      %s36 = sadd.s32 1, %s29
      %p37 = scmp.ge.s32.totalorder %s36, 1
      %s38 = scalar_select %p37, 0, %s36
      %s39 = sadd.s32 1, %s28
      %s40 = scalar_select %p37, %s39, %s28
      %p41 = scmp.ge.s32.totalorder %s40, 1
      %s42 = scalar_select %p41, 0, %s40
      %s43 = sadd.s32 1, %s27
      %s44 = scalar_select %p41, %s43, %s27
      %p45 = scmp.ge.s32.totalorder %s44, 2
      %s46 = scalar_select %p45, 0, %s44
      %s47 = ssub.s32 %s27, %s46
      %s48 = ssub.s32 %s28, %s42
      %s49 = sor.u32 %s47, %s48
      %p50 = scmp.eq.s32.totalorder %s49, 0
      %s52 = sadd.s32 %s51, 1
      %s53 = scalar_select %p50, %s51, %s52
      %p56 = pneg %p50
      %p57 = scmp.eq.s32.totalorder %s20, 1
      %p58 = por %p56, %p57
      %p59 = scmp.ne.s32.totalorder %s51, %s54
      %p60 = scmp.eq.s32.totalorder %s20, 0
      %p61 = por %p59, %p60
      %p62 = scmp.ne.s32.totalorder %s51, %s54
      %p63 = scmp.eq.s32.totalorder %s25, 1
      %p64 = por %p62, %p63
      %p65 = scmp.ne.s32.totalorder %s54, %s55
      %p66 = scmp.eq.s32.totalorder %s25, 0
      %p67 = por %p65, %p66
      %p68 = scmp.ne.s32.totalorder %s54, %s55
      %p69 = scmp.eq.s32.totalorder %s26, 1
      %p70 = por %p68, %p69
      %p72 = scmp.ne.s32.totalorder %s55, %s71
      %p73 = scmp.eq.s32.totalorder %s26, 0
      %p74 = por %p72, %p73
      %s75 = ssub.s32 %s27, %s46
      %s76 = ssub.s32 %s29, %s38
      %s77 = sor.u32 %s75, %s76
      %p78 = scmp.eq.s32.totalorder %s77, 0
      %s80 = sadd.s32 %s79, 1
      %s81 = scalar_select %p78, %s79, %s80
      %p84 = pneg %p78
      %p85 = scmp.eq.s32.totalorder %s20, 1
      %p86 = por %p84, %p85
      %p87 = scmp.ne.s32.totalorder %s79, %s82
      %p88 = scmp.eq.s32.totalorder %s20, 0
      %p89 = por %p87, %p88
      %p90 = scmp.ne.s32.totalorder %s79, %s82
      %p91 = scmp.eq.s32.totalorder %s25, 1
      %p92 = por %p90, %p91
      %p93 = scmp.ne.s32.totalorder %s82, %s83
      %p94 = scmp.eq.s32.totalorder %s25, 0
      %p95 = por %p93, %p94
      %p96 = scmp.ne.s32.totalorder %s82, %s83
      %p97 = scmp.eq.s32.totalorder %s26, 1
      %p98 = por %p96, %p97
      %p100 = scmp.ne.s32.totalorder %s83, %s99
      %p101 = scmp.eq.s32.totalorder %s26, 0
      %p102 = por %p100, %p101
      %s104 = sadd.s32 %s103, 1
      %p107 = scmp.eq.s32.totalorder %s20, 1
      %p108 = scmp.ne.s32.totalorder %s103, %s105
      %p109 = scmp.eq.s32.totalorder %s20, 0
      %p110 = por %p108, %p109
      %p111 = scmp.ne.s32.totalorder %s103, %s105
      %p112 = scmp.eq.s32.totalorder %s25, 1
      %p113 = por %p111, %p112
      %p114 = scmp.ne.s32.totalorder %s105, %s106
      %p115 = scmp.eq.s32.totalorder %s25, 0
      %p116 = por %p114, %p115
      %p117 = scmp.ne.s32.totalorder %s105, %s106
      %p118 = scmp.eq.s32.totalorder %s26, 1
      %p119 = por %p117, %p118
      %p121 = scmp.ne.s32.totalorder %s106, %s120
      %p122 = scmp.eq.s32.totalorder %s26, 0
      %p123 = por %p121, %p122
      %s125 = sadd.s32 %s124, 1
      %p128 = scmp.eq.s32.totalorder %s20, 1
      %p129 = scmp.ne.s32.totalorder %s124, %s126
      %p130 = scmp.eq.s32.totalorder %s20, 0
      %p131 = por %p129, %p130
      %p132 = scmp.ne.s32.totalorder %s124, %s126
      %p133 = scmp.eq.s32.totalorder %s25, 1
      %p134 = por %p132, %p133
      %p135 = scmp.ne.s32.totalorder %s126, %s127
      %p136 = scmp.eq.s32.totalorder %s25, 0
      %p137 = por %p135, %p136
      %p138 = scmp.ne.s32.totalorder %s126, %s127
      %p139 = scmp.eq.s32.totalorder %s26, 1
      %p140 = por %p138, %p139
      %p142 = scmp.ne.s32.totalorder %s127, %s141
      %p143 = scmp.eq.s32.totalorder %s26, 0
      %p144 = por %p142, %p143
      %s145 = ssub.s32 %s27, %s46
      %s146 = ssub.s32 %s28, %s42
      %s147 = sor.u32 %s145, %s146
      %p148 = scmp.eq.s32.totalorder %s147, 0
      %s150 = sadd.s32 %s149, 1
      %s151 = scalar_select %p148, %s149, %s150
      %p154 = pneg %p148
      %p155 = scmp.eq.s32.totalorder %s20, 1
      %p156 = por %p154, %p155
      %p157 = scmp.ne.s32.totalorder %s149, %s152
      %p158 = scmp.eq.s32.totalorder %s20, 0
      %p159 = por %p157, %p158
      %p160 = scmp.ne.s32.totalorder %s149, %s152
      %p161 = scmp.eq.s32.totalorder %s25, 1
      %p162 = por %p160, %p161
      %p163 = scmp.ne.s32.totalorder %s152, %s153
      %p164 = scmp.eq.s32.totalorder %s25, 0
      %p165 = por %p163, %p164
      %p166 = scmp.ne.s32.totalorder %s152, %s153
      %p167 = scmp.eq.s32.totalorder %s26, 1
      %p168 = por %p166, %p167
      %p170 = scmp.ne.s32.totalorder %s153, %s169
      %p171 = scmp.eq.s32.totalorder %s26, 0
      %p172 = por %p170, %p171
      %p173 = scmp.le.s32.totalorder 1, %s20
      %p174 = scmp.lt.s32.totalorder %s20, 3
      %p175 = pnand %p173, %p174
      %p176 = pneg %p175
      // Predicated region
      $region9: #{tpu_custom_call.1} parent=5 // pred_check
        _
      $region10: #{tpu_custom_call.1} parent=5 // pred_check_branch
        %178 = sbr.rel (%p175) target = $region12
      $region11: #{tpu_custom_call.1} parent=5 // pred_region
        %s179 = ssub.s32 %s20, 1
        // Predicated region
        $region13: #{tpu_custom_call.1} parent=11 // pred_check
          %p180 = pneg %p116
        $region14: #{tpu_custom_call.1} parent=11 // pred_check_branch
          %182 = sbr.rel (%p180) target = $region16
        $region15: #{tpu_custom_call.1} parent=11 // pred_region
          %s184 = ssub.s32 256, 256
          %185 = vsyncadd [#allocation9], %s184
          %s186 = sshll.u32 [#allocation10], 4
          %s187 = int_to_ptr.vmem [resolvable:$true] %s186
          %192 = dma.hbm_to_vmem [thread:$0]  %s2, 256, %s187, [#allocation9], 128, 128, 8
        $region16: #{tpu_custom_call.1} parent=11 // pred_fallthru
          _
        // Predicated region
        $region17: #{tpu_custom_call.1} parent=11 // pred_check
          %p193 = pneg %p137
        $region18: #{tpu_custom_call.1} parent=11 // pred_check_branch
          %195 = sbr.rel (%p193) target = $region20
        $region19: #{tpu_custom_call.1} parent=11 // pred_region
          %s197 = ssub.s32 512, 512
          %198 = vsyncadd [#allocation12], %s197
          %s199 = sshll.u32 [#allocation11], 4
          %s200 = int_to_ptr.vmem [resolvable:$true] %s199
          %205 = dma.hbm_to_vmem [thread:$0]  %s3, 512, %s200, [#allocation12], 128, 128, 8
        $region20: #{tpu_custom_call.1} parent=11 // pred_fallthru
          _
      $region12: #{tpu_custom_call.1} parent=5 // pred_fallthru
        _
      %p206 = scmp.lt.s32.totalorder %s20, 2
      // Predicated region
      $region21: #{tpu_custom_call.1} parent=5 // pred_check
        %p207 = pneg %p206
      $region22: #{tpu_custom_call.1} parent=5 // pred_check_branch
        %209 = sbr.rel (%p207) target = $region24
      $region23: #{tpu_custom_call.1} parent=5 // pred_region
        // Predicated region
        $region25: #{tpu_custom_call.1} parent=23 // pred_check
          %p210 = pneg %p61
        $region26: #{tpu_custom_call.1} parent=23 // pred_check_branch
          %212 = sbr.rel (%p210) target = $region28
        $region27: #{tpu_custom_call.1} parent=23 // pred_region
          %s213 = sand.u32 %s51, 1
          %s214 = scalar_lea.sflag [#allocation6], %s213
          %s215 = sand.u32 %s51, 1
          %s216 = smul.addr %s215, 8
          %s217 = scalar_lea.vmem [#allocation5], %s216
          %s219 = ssub.s32 128, 128
          %220 = vsyncadd %s214, %s219
          %s221 = sadd.s32 %s28, %s27
          %s222 = smul.addr %s221, 128
          %s223 = scalar_lea.hbm %s0, %s222
          %s225 = sshll.u32 %s217, 4
          %s226 = int_to_ptr.vmem [resolvable:$true] %s225
          %228 = dma.hbm_to_vmem [thread:$0]  %s223, 128, %s226, %s214
        $region28: #{tpu_custom_call.1} parent=23 // pred_fallthru
          _
        // Predicated region
        $region29: #{tpu_custom_call.1} parent=23 // pred_check
          %p229 = pneg %p89
        $region30: #{tpu_custom_call.1} parent=23 // pred_check_branch
          %231 = sbr.rel (%p229) target = $region32
        $region31: #{tpu_custom_call.1} parent=23 // pred_region
          %s232 = sand.u32 %s20, 1
          %s233 = scalar_lea.sflag [#allocation9], %s232
          %s234 = sand.u32 %s79, 1
          %s235 = smul.addr %s234, 8
          %s236 = scalar_lea.vmem [#allocation8], %s235
          %s238 = ssub.s32 128, 128
          %239 = vsyncadd %s233, %s238
          %s240 = sadd.s32 %s29, %s27
          %s241 = smul.addr %s240, 128
          %s242 = scalar_lea.hbm %s1, %s241
          %s244 = sshll.u32 %s236, 4
          %s245 = int_to_ptr.vmem [resolvable:$true] %s244
          %247 = dma.hbm_to_vmem [thread:$0]  %s242, 128, %s245, %s233
        $region32: #{tpu_custom_call.1} parent=23 // pred_fallthru
          _
      $region24: #{tpu_custom_call.1} parent=5 // pred_fallthru
        _
      %p248 = scmp.le.s32.totalorder 1, %s20
      %p249 = scmp.lt.s32.totalorder %s20, 3
      %p250 = pnand %p248, %p249
      %p251 = pneg %p250
      // Predicated region
      $region33: #{tpu_custom_call.1} parent=5 // pred_check
        _
      $region34: #{tpu_custom_call.1} parent=5 // pred_check_branch
        %253 = sbr.rel (%p250) target = $region36
      $region35: #{tpu_custom_call.1} parent=5 // pred_region
        %s254 = ssub.s32 %s20, 1
        %s255 = sand.u32 %s54, 1
        %s256 = scalar_lea.sflag [#allocation6], %s255
        %s257 = sand.u32 %s54, 1
        %s258 = smul.addr %s257, 8
        %s259 = scalar_lea.vmem [#allocation5], %s258
        // Predicated region
        $region37: #{tpu_custom_call.1} parent=35 // pred_check
          %p260 = pneg %p67
        $region38: #{tpu_custom_call.1} parent=35 // pred_check_branch
          %262 = sbr.rel (%p260) target = $region40
        $region39: #{tpu_custom_call.1} parent=35 // pred_region
          %263 = dma.done %s256, 128
        $region40: #{tpu_custom_call.1} parent=35 // pred_fallthru
          _
        %s264 = sand.u32 %s25, 1
        %s265 = scalar_lea.sflag [#allocation9], %s264
        %s266 = sand.u32 %s82, 1
        %s267 = smul.addr %s266, 8
        %s268 = scalar_lea.vmem [#allocation8], %s267
        // Predicated region
        $region41: #{tpu_custom_call.1} parent=35 // pred_check
          %p269 = pneg %p95
        $region42: #{tpu_custom_call.1} parent=35 // pred_check_branch
          %271 = sbr.rel (%p269) target = $region44
        $region43: #{tpu_custom_call.1} parent=35 // pred_region
          %272 = dma.done %s265, 128
        $region44: #{tpu_custom_call.1} parent=35 // pred_fallthru
          _
        // Predicated region
        $region45: #{tpu_custom_call.1} parent=35 // pred_check
          %p273 = pneg %p116
        $region46: #{tpu_custom_call.1} parent=35 // pred_check_branch
          %275 = sbr.rel (%p273) target = $region48
        $region47: #{tpu_custom_call.1} parent=35 // pred_region
          %276 = dma.done [#allocation9], 256
        $region48: #{tpu_custom_call.1} parent=35 // pred_fallthru
          _
        // Predicated region
        $region49: #{tpu_custom_call.1} parent=35 // pred_check
          %p277 = pneg %p137
        $region50: #{tpu_custom_call.1} parent=35 // pred_check_branch
          %279 = sbr.rel (%p277) target = $region52
        $region51: #{tpu_custom_call.1} parent=35 // pred_region
          %280 = dma.done [#allocation12], 512
        $region52: #{tpu_custom_call.1} parent=35 // pred_fallthru
          _
        %s281 = sand.u32 %s54, 1
        %s282 = scalar_lea.sflag [#allocation6], %s281
        %s283 = sand.u32 %s54, 1
        %s284 = smul.addr %s283, 8
        %s285 = scalar_lea.vmem [#allocation5], %s284
        %p286 = pneg %p67
        %p287 = pneg %p64
        %s288 = sand.u32 %s25, 1
        %s289 = scalar_lea.sflag [#allocation9], %s288
        %s290 = sand.u32 %s82, 1
        %s291 = smul.addr %s290, 8
        %s292 = scalar_lea.vmem [#allocation8], %s291
        %p293 = pneg %p95
        %p294 = pneg %p92
        %p295 = pneg %p116
        %p296 = pneg %p113
        %p297 = pneg %p137
        %p298 = pneg %p134
        %p299 = pneg %p165
        %p300 = pneg %p162
        %s301 = sand.u32 %s152, 1
        %s302 = scalar_lea.sflag [#allocation7], %s301
        %s303 = sand.u32 %s152, 1
        %s304 = smul.addr %s303, 8
        %s305 = scalar_lea.vmem [#allocation13], %s304
        %p306 = scmp.eq.s32.totalorder %s32, 0
        // Predicated region
        $region53: #{tpu_custom_call.1} parent=35 // pred_check
          %p307 = pneg %p306
        $region54: #{tpu_custom_call.1} parent=35 // pred_check_branch
          %309 = sbr.rel (%p307) target = $region56
        $region55: #{tpu_custom_call.1} parent=35 // pred_region
          %vm310 = vcmask 7168
          %311 = vst.msk [vmem:[#allocation2] sm:$0xff] %vm310, -inf
          %312 = vst.msk [vmem:[#allocation2 + $0x8] sm:$0xff] %vm310, -inf
          %313 = vst.msk [vmem:[#allocation2 + $0x10] sm:$0xff] %vm310, -inf
          %314 = vst.msk [vmem:[#allocation2 + $0x18] sm:$0xff] %vm310, -inf
          %315 = vst.msk [vmem:[#allocation3] sm:$0xff] %vm310, 0.0
          %316 = vst.msk [vmem:[#allocation3 + $0x8] sm:$0xff] %vm310, 0.0
          %317 = vst.msk [vmem:[#allocation3 + $0x10] sm:$0xff] %vm310, 0.0
          %318 = vst.msk [vmem:[#allocation3 + $0x18] sm:$0xff] %vm310, 0.0
          %vm319 = vcmask 64512
          %320 = vst.msk [vmem:[#allocation4] sm:$0xff] %vm319, 0.0
          %321 = vst.msk [vmem:[#allocation4 + $0x8] sm:$0xff] %vm319, 0.0
          %322 = vst.msk [vmem:[#allocation4 + $0x10] sm:$0xff] %vm319, 0.0
          %323 = vst.msk [vmem:[#allocation4 + $0x18] sm:$0xff] %vm319, 0.0
        $region56: #{tpu_custom_call.1} parent=35 // pred_fallthru
          _
        %v324 = vld [vmem:[#allocation10] sm:$0xff]
        %v325 = vld [vmem:[#allocation10 + $0x8] sm:$0xff]
        %v326 = vld [vmem:[#allocation11] sm:$0xff]
        %v327 = vld [vmem:[#allocation11 + $0x8] sm:$0xff]
        %v328 = vld [vmem:[#allocation11 + $0x10] sm:$0xff]
        %v329 = vld [vmem:[#allocation11 + $0x18] sm:$0xff]
        %v330 = vld [vmem:[%s259] sm:$0xff]
        %vm331 = vcmask 130048
        %v333 = vsel %vm331, %v330, 0
        %335 = vmatprep.subr.mxu0 0.0
        %336 = vmatpush1.msra.mxu0 %v324
        %337 = vmatprep.subr.mxu0 0.0
        %338 = vmatpush1.msra.mxu0 %v325
        %339 = vmatprep.subr.mxu0 0.0
        %340 = vmatpush1.msra.mxu0 0.0
        %341 = vmatprep.subr.mxu0 0.0
        %342 = vmatpush1.msra.mxu0 0.0
        %343 = vmatprep.subr.mxu0 0.0
        %344 = vmatpush1.msra.mxu0 0.0
        %345 = vmatprep.subr.mxu0 0.0
        %346 = vmatpush1.msra.mxu0 0.0
        %347 = vmatprep.subr.mxu0 0.0
        %348 = vmatpush1.msra.mxu0 0.0
        %349 = vmatprep.subr.mxu0 0.0
        %350 = vmatpush1.msra.mxu0 0.0
        %351 = vmatprep.subr.mxu0 0.0
        %352 = vmatpush1.msra.mxu0 0.0
        %353 = vmatprep.subr.mxu0 0.0
        %354 = vmatpush1.msra.mxu0 0.0
        %355 = vmatprep.subr.mxu0 0.0
        %356 = vmatpush1.msra.mxu0 0.0
        %357 = vmatprep.subr.mxu0 0.0
        %358 = vmatpush1.msra.mxu0 0.0
        %359 = vmatprep.subr.mxu0 0.0
        %360 = vmatpush1.msra.mxu0 0.0
        %361 = vmatprep.subr.mxu0 0.0
        %362 = vmatpush1.msra.mxu0 0.0
        %363 = vmatprep.subr.mxu0 0.0
        %364 = vmatpush1.msra.mxu0 0.0
        %365 = vmatprep.subr.mxu0 0.0
        %366 = vmatpush1.msra.mxu0 0.0
        %367 = vmatprep.subr.mxu0 0.0
        %368 = vmatpush1.msra.mxu0 0.0
        %369 = vmatprep.subr.mxu0 0.0
        %370 = vmatpush1.msra.mxu0 0.0
        %371 = vmatprep.subr.mxu0 0.0
        %372 = vmatpush1.msra.mxu0 0.0
        %373 = vmatprep.subr.mxu0 0.0
        %374 = vmatpush1.msra.mxu0 0.0
        %375 = vmatprep.subr.mxu0 0.0
        %376 = vmatpush1.msra.mxu0 0.0
        %377 = vmatprep.subr.mxu0 0.0
        %378 = vmatpush1.msra.mxu0 0.0
        %379 = vmatprep.subr.mxu0 0.0
        %380 = vmatpush1.msra.mxu0 0.0
        %381 = vmatprep.subr.mxu0 0.0
        %382 = vmatpush1.msra.mxu0 0.0
        %383 = vmatprep.subr.mxu0 0.0
        %384 = vmatpush1.msra.mxu0 0.0
        %385 = vmatprep.subr.mxu0 0.0
        %386 = vmatpush1.msra.mxu0 0.0
        %387 = vmatprep.subr.mxu0 0.0
        %388 = vmatpush1.msra.mxu0 0.0
        %389 = vmatprep.subr.mxu0 0.0
        %390 = vmatpush1.msra.mxu0 0.0
        %391 = vmatprep.subr.mxu0 0.0
        %392 = vmatpush1.msra.mxu0 0.0
        %393 = vmatprep.subr.mxu0 0.0
        %394 = vmatpush1.msra.mxu0 0.0
        %395 = vmatprep.subr.mxu0 0.0
        %396 = vmatpush1.msra.mxu0 0.0
        %397 = vmatprep.subr.mxu0 0.0
        %398 = vmatpush1.msra.mxu0 0.0
        %399 = vmatprep.mubr.f32.mxu0 0.0
        %400 = vmatmul.mubr.f32.gmra.mrb[0].mxu0 %v333
        %v401 = vpop.f32.mrb[0].mxu0
        %v402 = vadd.f32 0.0, %v401
        %v403 = vpop.f32.mrb[0].mxu0
        %404 = vdwg.mxu0
        %v405 = vld [vmem:[%s268] sm:$0xff]
        %v407 = vsel %vm331, %v405, 0
        %409 = vmatprep.subr.mxu0 0.0
        %410 = vmatpush1.msra.mxu0 %v324
        %411 = vmatprep.subr.mxu0 0.0
        %412 = vmatpush1.msra.mxu0 %v325
        %413 = vmatprep.subr.mxu0 0.0
        %414 = vmatpush1.msra.mxu0 0.0
        %415 = vmatprep.subr.mxu0 0.0
        %416 = vmatpush1.msra.mxu0 0.0
        %417 = vmatprep.subr.mxu0 0.0
        %418 = vmatpush1.msra.mxu0 0.0
        %419 = vmatprep.subr.mxu0 0.0
        %420 = vmatpush1.msra.mxu0 0.0
        %421 = vmatprep.subr.mxu0 0.0
        %422 = vmatpush1.msra.mxu0 0.0
        %423 = vmatprep.subr.mxu0 0.0
        %424 = vmatpush1.msra.mxu0 0.0
        %425 = vmatprep.subr.mxu0 0.0
        %426 = vmatpush1.msra.mxu0 0.0
        %427 = vmatprep.subr.mxu0 0.0
        %428 = vmatpush1.msra.mxu0 0.0
        %429 = vmatprep.subr.mxu0 0.0
        %430 = vmatpush1.msra.mxu0 0.0
        %431 = vmatprep.subr.mxu0 0.0
        %432 = vmatpush1.msra.mxu0 0.0
        %433 = vmatprep.subr.mxu0 0.0
        %434 = vmatpush1.msra.mxu0 0.0
        %435 = vmatprep.subr.mxu0 0.0
        %436 = vmatpush1.msra.mxu0 0.0
        %437 = vmatprep.subr.mxu0 0.0
        %438 = vmatpush1.msra.mxu0 0.0
        %439 = vmatprep.subr.mxu0 0.0
        %440 = vmatpush1.msra.mxu0 0.0
        %441 = vmatprep.subr.mxu0 0.0
        %442 = vmatpush1.msra.mxu0 0.0
        %443 = vmatprep.subr.mxu0 0.0
        %444 = vmatpush1.msra.mxu0 0.0
        %445 = vmatprep.subr.mxu0 0.0
        %446 = vmatpush1.msra.mxu0 0.0
        %447 = vmatprep.subr.mxu0 0.0
        %448 = vmatpush1.msra.mxu0 0.0
        %449 = vmatprep.subr.mxu0 0.0
        %450 = vmatpush1.msra.mxu0 0.0
        %451 = vmatprep.subr.mxu0 0.0
        %452 = vmatpush1.msra.mxu0 0.0
        %453 = vmatprep.subr.mxu0 0.0
        %454 = vmatpush1.msra.mxu0 0.0
        %455 = vmatprep.subr.mxu0 0.0
        %456 = vmatpush1.msra.mxu0 0.0
        %457 = vmatprep.subr.mxu0 0.0
        %458 = vmatpush1.msra.mxu0 0.0
        %459 = vmatprep.subr.mxu0 0.0
        %460 = vmatpush1.msra.mxu0 0.0
        %461 = vmatprep.subr.mxu0 0.0
        %462 = vmatpush1.msra.mxu0 0.0
        %463 = vmatprep.subr.mxu0 0.0
        %464 = vmatpush1.msra.mxu0 0.0
        %465 = vmatprep.subr.mxu0 0.0
        %466 = vmatpush1.msra.mxu0 0.0
        %467 = vmatprep.subr.mxu0 0.0
        %468 = vmatpush1.msra.mxu0 0.0
        %469 = vmatprep.subr.mxu0 0.0
        %470 = vmatpush1.msra.mxu0 0.0
        %471 = vmatprep.subr.mxu0 0.0
        %472 = vmatpush1.msra.mxu0 0.0
        %473 = vmatprep.mubr.f32.mxu0 0.0
        %474 = vmatmul.mubr.f32.gmra.mrb[0].mxu0 %v407
        %v475 = vpop.f32.mrb[0].mxu0
        %v476 = vadd.f32 0.0, %v475
        %v477 = vpop.f32.mrb[0].mxu0
        %478 = vdwg.mxu0
        %vm479 = vcmask 261120
        %v481 = vsel %vm479, %v402, 0
        %483 = vmatprep.subr.mxu0 0.0
        %484 = vmatpush1.msra.mxu0 %v326
        %485 = vmatprep.subr.mxu0 0.0
        %486 = vmatpush1.msra.mxu0 %v327
        %487 = vmatprep.subr.mxu0 0.0
        %488 = vmatpush1.msra.mxu0 %v328
        %489 = vmatprep.subr.mxu0 0.0
        %490 = vmatpush1.msra.mxu0 %v329
        %491 = vmatprep.subr.mxu0 0.0
        %492 = vmatpush1.msra.mxu0 0.0
        %493 = vmatprep.subr.mxu0 0.0
        %494 = vmatpush1.msra.mxu0 0.0
        %495 = vmatprep.subr.mxu0 0.0
        %496 = vmatpush1.msra.mxu0 0.0
        %497 = vmatprep.subr.mxu0 0.0
        %498 = vmatpush1.msra.mxu0 0.0
        %499 = vmatprep.subr.mxu0 0.0
        %500 = vmatpush1.msra.mxu0 0.0
        %501 = vmatprep.subr.mxu0 0.0
        %502 = vmatpush1.msra.mxu0 0.0
        %503 = vmatprep.subr.mxu0 0.0
        %504 = vmatpush1.msra.mxu0 0.0
        %505 = vmatprep.subr.mxu0 0.0
        %506 = vmatpush1.msra.mxu0 0.0
        %507 = vmatprep.subr.mxu0 0.0
        %508 = vmatpush1.msra.mxu0 0.0
        %509 = vmatprep.subr.mxu0 0.0
        %510 = vmatpush1.msra.mxu0 0.0
        %511 = vmatprep.subr.mxu0 0.0
        %512 = vmatpush1.msra.mxu0 0.0
        %513 = vmatprep.subr.mxu0 0.0
        %514 = vmatpush1.msra.mxu0 0.0
        %515 = vmatprep.subr.mxu0 0.0
        %516 = vmatpush1.msra.mxu0 0.0
        %517 = vmatprep.subr.mxu0 0.0
        %518 = vmatpush1.msra.mxu0 0.0
        %519 = vmatprep.subr.mxu0 0.0
        %520 = vmatpush1.msra.mxu0 0.0
        %521 = vmatprep.subr.mxu0 0.0
        %522 = vmatpush1.msra.mxu0 0.0
        %523 = vmatprep.subr.mxu0 0.0
        %524 = vmatpush1.msra.mxu0 0.0
        %525 = vmatprep.subr.mxu0 0.0
        %526 = vmatpush1.msra.mxu0 0.0
        %527 = vmatprep.subr.mxu0 0.0
        %528 = vmatpush1.msra.mxu0 0.0
        %529 = vmatprep.subr.mxu0 0.0
        %530 = vmatpush1.msra.mxu0 0.0
        %531 = vmatprep.subr.mxu0 0.0
        %532 = vmatpush1.msra.mxu0 0.0
        %533 = vmatprep.subr.mxu0 0.0
        %534 = vmatpush1.msra.mxu0 0.0
        %535 = vmatprep.subr.mxu0 0.0
        %536 = vmatpush1.msra.mxu0 0.0
        %537 = vmatprep.subr.mxu0 0.0
        %538 = vmatpush1.msra.mxu0 0.0
        %539 = vmatprep.subr.mxu0 0.0
        %540 = vmatpush1.msra.mxu0 0.0
        %541 = vmatprep.subr.mxu0 0.0
        %542 = vmatpush1.msra.mxu0 0.0
        %543 = vmatprep.subr.mxu0 0.0
        %544 = vmatpush1.msra.mxu0 0.0
        %545 = vmatprep.subr.mxu0 0.0
        %546 = vmatpush1.msra.mxu0 0.0
        %547 = vmatprep.mubr.f32.mxu0 0.0
        %548 = vmatmul.mubr.f32.gmra.mrb[0].mxu0 %v481
        %v549 = vpop.f32.mrb[0].mxu0
        %v550 = vadd.f32 0.0, %v549
        %v551 = vpop.f32.mrb[0].mxu0
        %552 = vdwg.mxu0
        %v554 = vsel %vm479, %v476, 0
        %556 = vmatprep.subr.mxu0 0.0
        %557 = vmatpush1.msra.mxu0 %v326
        %558 = vmatprep.subr.mxu0 0.0
        %559 = vmatpush1.msra.mxu0 %v327
        %560 = vmatprep.subr.mxu0 0.0
        %561 = vmatpush1.msra.mxu0 %v328
        %562 = vmatprep.subr.mxu0 0.0
        %563 = vmatpush1.msra.mxu0 %v329
        %564 = vmatprep.subr.mxu0 0.0
        %565 = vmatpush1.msra.mxu0 0.0
        %566 = vmatprep.subr.mxu0 0.0
        %567 = vmatpush1.msra.mxu0 0.0
        %568 = vmatprep.subr.mxu0 0.0
        %569 = vmatpush1.msra.mxu0 0.0
        %570 = vmatprep.subr.mxu0 0.0
        %571 = vmatpush1.msra.mxu0 0.0
        %572 = vmatprep.subr.mxu0 0.0
        %573 = vmatpush1.msra.mxu0 0.0
        %574 = vmatprep.subr.mxu0 0.0
        %575 = vmatpush1.msra.mxu0 0.0
        %576 = vmatprep.subr.mxu0 0.0
        %577 = vmatpush1.msra.mxu0 0.0
        %578 = vmatprep.subr.mxu0 0.0
        %579 = vmatpush1.msra.mxu0 0.0
        %580 = vmatprep.subr.mxu0 0.0
        %581 = vmatpush1.msra.mxu0 0.0
        %582 = vmatprep.subr.mxu0 0.0
        %583 = vmatpush1.msra.mxu0 0.0
        %584 = vmatprep.subr.mxu0 0.0
        %585 = vmatpush1.msra.mxu0 0.0
        %586 = vmatprep.subr.mxu0 0.0
        %587 = vmatpush1.msra.mxu0 0.0
        %588 = vmatprep.subr.mxu0 0.0
        %589 = vmatpush1.msra.mxu0 0.0
        %590 = vmatprep.subr.mxu0 0.0
        %591 = vmatpush1.msra.mxu0 0.0
        %592 = vmatprep.subr.mxu0 0.0
        %593 = vmatpush1.msra.mxu0 0.0
        %594 = vmatprep.subr.mxu0 0.0
        %595 = vmatpush1.msra.mxu0 0.0
        %596 = vmatprep.subr.mxu0 0.0
        %597 = vmatpush1.msra.mxu0 0.0
        %598 = vmatprep.subr.mxu0 0.0
        %599 = vmatpush1.msra.mxu0 0.0
        %600 = vmatprep.subr.mxu0 0.0
        %601 = vmatpush1.msra.mxu0 0.0
        %602 = vmatprep.subr.mxu0 0.0
        %603 = vmatpush1.msra.mxu0 0.0
        %604 = vmatprep.subr.mxu0 0.0
        %605 = vmatpush1.msra.mxu0 0.0
        %606 = vmatprep.subr.mxu0 0.0
        %607 = vmatpush1.msra.mxu0 0.0
        %608 = vmatprep.subr.mxu0 0.0
        %609 = vmatpush1.msra.mxu0 0.0
        %610 = vmatprep.subr.mxu0 0.0
        %611 = vmatpush1.msra.mxu0 0.0
        %612 = vmatprep.subr.mxu0 0.0
        %613 = vmatpush1.msra.mxu0 0.0
        %614 = vmatprep.subr.mxu0 0.0
        %615 = vmatpush1.msra.mxu0 0.0
        %616 = vmatprep.subr.mxu0 0.0
        %617 = vmatpush1.msra.mxu0 0.0
        %618 = vmatprep.subr.mxu0 0.0
        %619 = vmatpush1.msra.mxu0 0.0
        %620 = vmatprep.mubr.f32.mxu0 0.0
        %621 = vmatmul.mubr.f32.gmra.mrb[0].mxu0 %v554
        %v622 = vpop.f32.mrb[0].mxu0
        %v623 = vadd.f32 0.0, %v622
        %v624 = vpop.f32.mrb[0].mxu0
        %625 = vdwg.mxu0
        %627 = vrot.lane.b32.xlu0 %v623, 124
        %v628 = vpop.permute.xlu0 %627
        %630 = vxpose.xlu0.b32.start [1/16] %v628, 128
        %631 = vxpose.xlu0.b32.cont [2/16] 0.0, 128
        %632 = vxpose.xlu0.b32.cont [3/16] 0.0, 128
        %633 = vxpose.xlu0.b32.cont [4/16] 0.0, 128
        %634 = vxpose.xlu0.b32.cont [5/16] 0.0, 128
        %635 = vxpose.xlu0.b32.cont [6/16] 0.0, 128
        %636 = vxpose.xlu0.b32.cont [7/16] 0.0, 128
        %637 = vxpose.xlu0.b32.cont [8/16] 0.0, 128
        %638 = vxpose.xlu0.b32.cont [9/16] 0.0, 128
        %639 = vxpose.xlu0.b32.cont [10/16] 0.0, 128
        %640 = vxpose.xlu0.b32.cont [11/16] 0.0, 128
        %641 = vxpose.xlu0.b32.cont [12/16] 0.0, 128
        %642 = vxpose.xlu0.b32.cont [13/16] 0.0, 128
        %643 = vxpose.xlu0.b32.cont [14/16] 0.0, 128
        %644 = vxpose.xlu0.b32.cont [15/16] 0.0, 128
        %645 = vxpose.xlu0.b32.end [16/16] 0.0, 128
        %v646 = vpop.trf.xlu0
        %v647 = vpop.trf.xlu0
        %v648 = vpop.trf.xlu0
        %v649 = vpop.trf.xlu0
        %v650 = vpop.trf.xlu0
        %v651 = vpop.trf.xlu0
        %v652 = vpop.trf.xlu0
        %v653 = vpop.trf.xlu0
        %v654 = vpop.trf.xlu0
        %v655 = vpop.trf.xlu0
        %v656 = vpop.trf.xlu0
        %v657 = vpop.trf.xlu0
        %v658 = vpop.trf.xlu0
        %v659 = vpop.trf.xlu0
        %v660 = vpop.trf.xlu0
        %v661 = vpop.trf.xlu0
        %663 = vset.pattern.permute.xlu0 0
        %664 = vperm.xlu0 %663, %v550
        %v665 = vpop.permute.xlu0 %664
        %v667 = vlaneseq
        %v668 = vshrl.u32 %v667, 7
        %v669 = vsub.s32 0, %v668
        %v670 = vrot.slane %v646, %v669
        %v671 = vadd.f32 %v665, %v670
        %vm672 = vcmp.gt.f32.partialorder %v671, 0.0
        %v673 = vmul.f32 %v671, 0.2
        %v674 = vsel %vm672, %v671, %v673
        %v675 = vld [vmem:[#allocation2] sm:$0xff]
        %vm676 = vcmask 64512
        %v677 = vsel %vm676, %v674, -inf
        %678 = vmax.xlane.f32.xlu0 %v677
        %v679 = vpop.xlane.xlu0 %678
        %v680 = vmax.f32 %v675, %v679
        %v681 = vsub.f32 %v675, %v680
        %v682 = vmul.f32 %v681, 1.442695
        %v683 = vpow.pop %v682
        %685 = vset.pattern.permute.xlu0 0
        %686 = vperm.xlu0 %685, %v680
        %v687 = vpop.permute.xlu0 %686
        %v689 = vsub.f32 %v674, %v687
        %v690 = vmul.f32 %v689, 1.442695
        %v691 = vpow.pop %v690
        %v692 = vld [vmem:[#allocation3] sm:$0xff]
        %v693 = vmul.f32 %v683, %v692
        %v694 = vsel %vm676, %v691, 0.0
        %695 = vadd.xlane.f32.xlu0 %v694
        %v696 = vpop.xlane.xlu0 %695
        %v697 = vadd.f32 %v693, %v696
        %vm698 = vcmask 7168
        %699 = vst.msk [vmem:[#allocation3] sm:$0xff] %vm698, %v697
        %v700 = vld [vmem:[#allocation4] sm:$0xff]
        %702 = vset.pattern.permute.xlu0 0
        %703 = vperm.xlu0 %702, %v683
        %v704 = vpop.permute.xlu0 %703
        %v706 = vmul.f32 %v704, %v700
        %v708 = vsel %vm676, %v691, 0
        %710 = vmatprep.subr.mxu0 0.0
        %711 = vmatpush1.msra.mxu0 %v476
        %712 = vmatprep.subr.mxu0 0.0
        %713 = vmatpush1.msra.mxu0 0.0
        %714 = vmatprep.subr.mxu0 0.0
        %715 = vmatpush1.msra.mxu0 0.0
        %716 = vmatprep.subr.mxu0 0.0
        %717 = vmatpush1.msra.mxu0 0.0
        %718 = vmatprep.subr.mxu0 0.0
        %719 = vmatpush1.msra.mxu0 0.0
        %720 = vmatprep.subr.mxu0 0.0
        %721 = vmatpush1.msra.mxu0 0.0
        %722 = vmatprep.subr.mxu0 0.0
        %723 = vmatpush1.msra.mxu0 0.0
        %724 = vmatprep.subr.mxu0 0.0
        %725 = vmatpush1.msra.mxu0 0.0
        %726 = vmatprep.subr.mxu0 0.0
        %727 = vmatpush1.msra.mxu0 0.0
        %728 = vmatprep.subr.mxu0 0.0
        %729 = vmatpush1.msra.mxu0 0.0
        %730 = vmatprep.subr.mxu0 0.0
        %731 = vmatpush1.msra.mxu0 0.0
        %732 = vmatprep.subr.mxu0 0.0
        %733 = vmatpush1.msra.mxu0 0.0
        %734 = vmatprep.subr.mxu0 0.0
        %735 = vmatpush1.msra.mxu0 0.0
        %736 = vmatprep.subr.mxu0 0.0
        %737 = vmatpush1.msra.mxu0 0.0
        %738 = vmatprep.subr.mxu0 0.0
        %739 = vmatpush1.msra.mxu0 0.0
        %740 = vmatprep.subr.mxu0 0.0
        %741 = vmatpush1.msra.mxu0 0.0
        %742 = vmatprep.subr.mxu0 0.0
        %743 = vmatpush1.msra.mxu0 0.0
        %744 = vmatprep.subr.mxu0 0.0
        %745 = vmatpush1.msra.mxu0 0.0
        %746 = vmatprep.subr.mxu0 0.0
        %747 = vmatpush1.msra.mxu0 0.0
        %748 = vmatprep.subr.mxu0 0.0
        %749 = vmatpush1.msra.mxu0 0.0
        %750 = vmatprep.subr.mxu0 0.0
        %751 = vmatpush1.msra.mxu0 0.0
        %752 = vmatprep.subr.mxu0 0.0
        %753 = vmatpush1.msra.mxu0 0.0
        %754 = vmatprep.subr.mxu0 0.0
        %755 = vmatpush1.msra.mxu0 0.0
        %756 = vmatprep.subr.mxu0 0.0
        %757 = vmatpush1.msra.mxu0 0.0
        %758 = vmatprep.subr.mxu0 0.0
        %759 = vmatpush1.msra.mxu0 0.0
        %760 = vmatprep.subr.mxu0 0.0
        %761 = vmatpush1.msra.mxu0 0.0
        %762 = vmatprep.subr.mxu0 0.0
        %763 = vmatpush1.msra.mxu0 0.0
        %764 = vmatprep.subr.mxu0 0.0
        %765 = vmatpush1.msra.mxu0 0.0
        %766 = vmatprep.subr.mxu0 0.0
        %767 = vmatpush1.msra.mxu0 0.0
        %768 = vmatprep.subr.mxu0 0.0
        %769 = vmatpush1.msra.mxu0 0.0
        %770 = vmatprep.subr.mxu0 0.0
        %771 = vmatpush1.msra.mxu0 0.0
        %772 = vmatprep.subr.mxu0 0.0
        %773 = vmatpush1.msra.mxu0 0.0
        %774 = vmatprep.mubr.f32.mxu0 0.0
        %775 = vmatmul.mubr.f32.gmra.mrb[0].mxu0 %v708
        %v776 = vpop.f32.mrb[0].mxu0
        %v777 = vadd.f32 0.0, %v776
        %v778 = vpop.f32.mrb[0].mxu0
        %779 = vdwg.mxu0
        %v780 = vadd.f32 %v706, %v777
        %781 = vst.msk [vmem:[#allocation4] sm:$0xff] %vm676, %v780
        %782 = vst.msk [vmem:[#allocation2] sm:$0xff] %vm698, %v680
        %783 = vset.pattern.permute.xlu0 1
        %784 = vperm.xlu0 %783, %v550
        %v785 = vpop.permute.xlu0 %784
        %v787 = vlaneseq
        %v788 = vshrl.u32 %v787, 7
        %v789 = vsub.s32 1, %v788
        %v790 = vrot.slane %v646, %v789
        %v791 = vadd.f32 %v785, %v790
        %vm792 = vcmp.gt.f32.partialorder %v791, 0.0
        %v793 = vmul.f32 %v791, 0.2
        %v794 = vsel %vm792, %v791, %v793
        %s795 = scalar_lea.vmem [#allocation2], 8
        %v796 = vld [vmem:[%s795] sm:$0xff]
        %v797 = vsel %vm676, %v794, -inf
        %798 = vmax.xlane.f32.xlu0 %v797
        %v799 = vpop.xlane.xlu0 %798
        %v800 = vmax.f32 %v796, %v799
        %v801 = vsub.f32 %v796, %v800
        %v802 = vmul.f32 %v801, 1.442695
        %v803 = vpow.pop %v802
        %805 = vset.pattern.permute.xlu0 0
        %806 = vperm.xlu0 %805, %v800
        %v807 = vpop.permute.xlu0 %806
        %v809 = vsub.f32 %v794, %v807
        %v810 = vmul.f32 %v809, 1.442695
        %v811 = vpow.pop %v810
        %s812 = scalar_lea.vmem [#allocation3], 8
        %v813 = vld [vmem:[%s812] sm:$0xff]
        %v814 = vmul.f32 %v803, %v813
        %v815 = vsel %vm676, %v811, 0.0
        %816 = vadd.xlane.f32.xlu0 %v815
        %v817 = vpop.xlane.xlu0 %816
        %v818 = vadd.f32 %v814, %v817
        %819 = vst.msk [vmem:[%s812] sm:$0xff] %vm698, %v818
        %s820 = scalar_lea.vmem [#allocation4], 8
        %v821 = vld [vmem:[%s820] sm:$0xff]
        %823 = vset.pattern.permute.xlu0 0
        %824 = vperm.xlu0 %823, %v803
        %v825 = vpop.permute.xlu0 %824
        %v827 = vmul.f32 %v825, %v821
        %828 = vrot.lane.b32.xlu0 %v476, 120
        %v829 = vpop.permute.xlu0 %828
        %v832 = vsel %vm676, %v811, 0
        %834 = vmatprep.subr.mxu0 0.0
        %835 = vmatpush1.msra.mxu0 %v829
        %836 = vmatprep.subr.mxu0 0.0
        %837 = vmatpush1.msra.mxu0 0.0
        %838 = vmatprep.subr.mxu0 0.0
        %839 = vmatpush1.msra.mxu0 0.0
        %840 = vmatprep.subr.mxu0 0.0
        %841 = vmatpush1.msra.mxu0 0.0
        %842 = vmatprep.subr.mxu0 0.0
        %843 = vmatpush1.msra.mxu0 0.0
        %844 = vmatprep.subr.mxu0 0.0
        %845 = vmatpush1.msra.mxu0 0.0
        %846 = vmatprep.subr.mxu0 0.0
        %847 = vmatpush1.msra.mxu0 0.0
        %848 = vmatprep.subr.mxu0 0.0
        %849 = vmatpush1.msra.mxu0 0.0
        %850 = vmatprep.subr.mxu0 0.0
        %851 = vmatpush1.msra.mxu0 0.0
        %852 = vmatprep.subr.mxu0 0.0
        %853 = vmatpush1.msra.mxu0 0.0
        %854 = vmatprep.subr.mxu0 0.0
        %855 = vmatpush1.msra.mxu0 0.0
        %856 = vmatprep.subr.mxu0 0.0
        %857 = vmatpush1.msra.mxu0 0.0
        %858 = vmatprep.subr.mxu0 0.0
        %859 = vmatpush1.msra.mxu0 0.0
        %860 = vmatprep.subr.mxu0 0.0
        %861 = vmatpush1.msra.mxu0 0.0
        %862 = vmatprep.subr.mxu0 0.0
        %863 = vmatpush1.msra.mxu0 0.0
        %864 = vmatprep.subr.mxu0 0.0
        %865 = vmatpush1.msra.mxu0 0.0
        %866 = vmatprep.subr.mxu0 0.0
        %867 = vmatpush1.msra.mxu0 0.0
        %868 = vmatprep.subr.mxu0 0.0
        %869 = vmatpush1.msra.mxu0 0.0
        %870 = vmatprep.subr.mxu0 0.0
        %871 = vmatpush1.msra.mxu0 0.0
        %872 = vmatprep.subr.mxu0 0.0
        %873 = vmatpush1.msra.mxu0 0.0
        %874 = vmatprep.subr.mxu0 0.0
        %875 = vmatpush1.msra.mxu0 0.0
        %876 = vmatprep.subr.mxu0 0.0
        %877 = vmatpush1.msra.mxu0 0.0
        %878 = vmatprep.subr.mxu0 0.0
        %879 = vmatpush1.msra.mxu0 0.0
        %880 = vmatprep.subr.mxu0 0.0
        %881 = vmatpush1.msra.mxu0 0.0
        %882 = vmatprep.subr.mxu0 0.0
        %883 = vmatpush1.msra.mxu0 0.0
        %884 = vmatprep.subr.mxu0 0.0
        %885 = vmatpush1.msra.mxu0 0.0
        %886 = vmatprep.subr.mxu0 0.0
        %887 = vmatpush1.msra.mxu0 0.0
        %888 = vmatprep.subr.mxu0 0.0
        %889 = vmatpush1.msra.mxu0 0.0
        %890 = vmatprep.subr.mxu0 0.0
        %891 = vmatpush1.msra.mxu0 0.0
        %892 = vmatprep.subr.mxu0 0.0
        %893 = vmatpush1.msra.mxu0 0.0
        %894 = vmatprep.subr.mxu0 0.0
        %895 = vmatpush1.msra.mxu0 0.0
        %896 = vmatprep.subr.mxu0 0.0
        %897 = vmatpush1.msra.mxu0 0.0
        %898 = vmatprep.mubr.f32.mxu0 0.0
        %899 = vmatmul.mubr.f32.gmra.mrb[0].mxu0 %v832
        %v900 = vpop.f32.mrb[0].mxu0
        %v901 = vadd.f32 0.0, %v900
        %v902 = vpop.f32.mrb[0].mxu0
        %903 = vdwg.mxu0
        %v904 = vadd.f32 %v827, %v901
        %905 = vst.msk [vmem:[%s820] sm:$0xff] %vm676, %v904
        %906 = vst.msk [vmem:[%s795] sm:$0xff] %vm698, %v800
        %907 = vset.pattern.permute.xlu0 2
        %908 = vperm.xlu0 %907, %v550
        %v909 = vpop.permute.xlu0 %908
        %v911 = vlaneseq
        %v912 = vshrl.u32 %v911, 7
        %v913 = vsub.s32 2, %v912
        %v914 = vrot.slane %v646, %v913
        %v915 = vadd.f32 %v909, %v914
        %vm916 = vcmp.gt.f32.partialorder %v915, 0.0
        %v917 = vmul.f32 %v915, 0.2
        %v918 = vsel %vm916, %v915, %v917
        %s919 = scalar_lea.vmem [#allocation2], 16
        %v920 = vld [vmem:[%s919] sm:$0xff]
        %v921 = vsel %vm676, %v918, -inf
        %922 = vmax.xlane.f32.xlu0 %v921
        %v923 = vpop.xlane.xlu0 %922
        %v924 = vmax.f32 %v920, %v923
        %v925 = vsub.f32 %v920, %v924
        %v926 = vmul.f32 %v925, 1.442695
        %v927 = vpow.pop %v926
        %929 = vset.pattern.permute.xlu0 0
        %930 = vperm.xlu0 %929, %v924
        %v931 = vpop.permute.xlu0 %930
        %v933 = vsub.f32 %v918, %v931
        %v934 = vmul.f32 %v933, 1.442695
        %v935 = vpow.pop %v934
        %s936 = scalar_lea.vmem [#allocation3], 16
        %v937 = vld [vmem:[%s936] sm:$0xff]
        %v938 = vmul.f32 %v927, %v937
        %v939 = vsel %vm676, %v935, 0.0
        %940 = vadd.xlane.f32.xlu0 %v939
        %v941 = vpop.xlane.xlu0 %940
        %v942 = vadd.f32 %v938, %v941
        %943 = vst.msk [vmem:[%s936] sm:$0xff] %vm698, %v942
        %s944 = scalar_lea.vmem [#allocation4], 16
        %v945 = vld [vmem:[%s944] sm:$0xff]
        %947 = vset.pattern.permute.xlu0 0
        %948 = vperm.xlu0 %947, %v927
        %v949 = vpop.permute.xlu0 %948
        %v951 = vmul.f32 %v949, %v945
        %952 = vrot.lane.b32.xlu0 %v476, 112
        %v953 = vpop.permute.xlu0 %952
        %v956 = vsel %vm676, %v935, 0
        %958 = vmatprep.subr.mxu0 0.0
        %959 = vmatpush1.msra.mxu0 %v953
        %960 = vmatprep.subr.mxu0 0.0
        %961 = vmatpush1.msra.mxu0 0.0
        %962 = vmatprep.subr.mxu0 0.0
        %963 = vmatpush1.msra.mxu0 0.0
        %964 = vmatprep.subr.mxu0 0.0
        %965 = vmatpush1.msra.mxu0 0.0
        %966 = vmatprep.subr.mxu0 0.0
        %967 = vmatpush1.msra.mxu0 0.0
        %968 = vmatprep.subr.mxu0 0.0
        %969 = vmatpush1.msra.mxu0 0.0
        %970 = vmatprep.subr.mxu0 0.0
        %971 = vmatpush1.msra.mxu0 0.0
        %972 = vmatprep.subr.mxu0 0.0
        %973 = vmatpush1.msra.mxu0 0.0
        %974 = vmatprep.subr.mxu0 0.0
        %975 = vmatpush1.msra.mxu0 0.0
        %976 = vmatprep.subr.mxu0 0.0
        %977 = vmatpush1.msra.mxu0 0.0
        %978 = vmatprep.subr.mxu0 0.0
        %979 = vmatpush1.msra.mxu0 0.0
        %980 = vmatprep.subr.mxu0 0.0
        %981 = vmatpush1.msra.mxu0 0.0
        %982 = vmatprep.subr.mxu0 0.0
        %983 = vmatpush1.msra.mxu0 0.0
        %984 = vmatprep.subr.mxu0 0.0
        %985 = vmatpush1.msra.mxu0 0.0
        %986 = vmatprep.subr.mxu0 0.0
        %987 = vmatpush1.msra.mxu0 0.0
        %988 = vmatprep.subr.mxu0 0.0
        %989 = vmatpush1.msra.mxu0 0.0
        %990 = vmatprep.subr.mxu0 0.0
        %991 = vmatpush1.msra.mxu0 0.0
        %992 = vmatprep.subr.mxu0 0.0
        %993 = vmatpush1.msra.mxu0 0.0
        %994 = vmatprep.subr.mxu0 0.0
        %995 = vmatpush1.msra.mxu0 0.0
        %996 = vmatprep.subr.mxu0 0.0
        %997 = vmatpush1.msra.mxu0 0.0
        %998 = vmatprep.subr.mxu0 0.0
        %999 = vmatpush1.msra.mxu0 0.0
        %1000 = vmatprep.subr.mxu0 0.0
        %1001 = vmatpush1.msra.mxu0 0.0
        %1002 = vmatprep.subr.mxu0 0.0
        %1003 = vmatpush1.msra.mxu0 0.0
        %1004 = vmatprep.subr.mxu0 0.0
        %1005 = vmatpush1.msra.mxu0 0.0
        %1006 = vmatprep.subr.mxu0 0.0
        %1007 = vmatpush1.msra.mxu0 0.0
        %1008 = vmatprep.subr.mxu0 0.0
        %1009 = vmatpush1.msra.mxu0 0.0
        %1010 = vmatprep.subr.mxu0 0.0
        %1011 = vmatpush1.msra.mxu0 0.0
        %1012 = vmatprep.subr.mxu0 0.0
        %1013 = vmatpush1.msra.mxu0 0.0
        %1014 = vmatprep.subr.mxu0 0.0
        %1015 = vmatpush1.msra.mxu0 0.0
        %1016 = vmatprep.subr.mxu0 0.0
        %1017 = vmatpush1.msra.mxu0 0.0
        %1018 = vmatprep.subr.mxu0 0.0
        %1019 = vmatpush1.msra.mxu0 0.0
        %1020 = vmatprep.subr.mxu0 0.0
        %1021 = vmatpush1.msra.mxu0 0.0
        %1022 = vmatprep.mubr.f32.mxu0 0.0
        %1023 = vmatmul.mubr.f32.gmra.mrb[0].mxu0 %v956
        %v1024 = vpop.f32.mrb[0].mxu0
        %v1025 = vadd.f32 0.0, %v1024
        %v1026 = vpop.f32.mrb[0].mxu0
        %1027 = vdwg.mxu0
        %v1028 = vadd.f32 %v951, %v1025
        %1029 = vst.msk [vmem:[%s944] sm:$0xff] %vm676, %v1028
        %1030 = vst.msk [vmem:[%s919] sm:$0xff] %vm698, %v924
        %1031 = vset.pattern.permute.xlu0 3
        %1032 = vperm.xlu0 %1031, %v550
        %v1033 = vpop.permute.xlu0 %1032
        %v1035 = vlaneseq
        %v1036 = vshrl.u32 %v1035, 7
        %v1037 = vsub.s32 3, %v1036
        %v1038 = vrot.slane %v646, %v1037
        %v1039 = vadd.f32 %v1033, %v1038
        %vm1040 = vcmp.gt.f32.partialorder %v1039, 0.0
        %v1041 = vmul.f32 %v1039, 0.2
        %v1042 = vsel %vm1040, %v1039, %v1041
        %s1043 = scalar_lea.vmem [#allocation2], 24
        %v1044 = vld [vmem:[%s1043] sm:$0xff]
        %v1045 = vsel %vm676, %v1042, -inf
        %1046 = vmax.xlane.f32.xlu0 %v1045
        %v1047 = vpop.xlane.xlu0 %1046
        %v1048 = vmax.f32 %v1044, %v1047
        %v1049 = vsub.f32 %v1044, %v1048
        %v1050 = vmul.f32 %v1049, 1.442695
        %v1051 = vpow.pop %v1050
        %1053 = vset.pattern.permute.xlu0 0
        %1054 = vperm.xlu0 %1053, %v1048
        %v1055 = vpop.permute.xlu0 %1054
        %v1057 = vsub.f32 %v1042, %v1055
        %v1058 = vmul.f32 %v1057, 1.442695
        %v1059 = vpow.pop %v1058
        %s1060 = scalar_lea.vmem [#allocation3], 24
        %v1061 = vld [vmem:[%s1060] sm:$0xff]
        %v1062 = vmul.f32 %v1051, %v1061
        %v1063 = vsel %vm676, %v1059, 0.0
        %1064 = vadd.xlane.f32.xlu0 %v1063
        %v1065 = vpop.xlane.xlu0 %1064
        %v1066 = vadd.f32 %v1062, %v1065
        %1067 = vst.msk [vmem:[%s1060] sm:$0xff] %vm698, %v1066
        %s1068 = scalar_lea.vmem [#allocation4], 24
        %v1069 = vld [vmem:[%s1068] sm:$0xff]
        %1071 = vset.pattern.permute.xlu0 0
        %1072 = vperm.xlu0 %1071, %v1051
        %v1073 = vpop.permute.xlu0 %1072
        %v1075 = vmul.f32 %v1073, %v1069
        %1076 = vrot.lane.b32.xlu0 %v476, 104
        %v1077 = vpop.permute.xlu0 %1076
        %v1080 = vsel %vm676, %v1059, 0
        %1082 = vmatprep.subr.mxu0 0.0
        %1083 = vmatpush1.msra.mxu0 %v1077
        %1084 = vmatprep.subr.mxu0 0.0
        %1085 = vmatpush1.msra.mxu0 0.0
        %1086 = vmatprep.subr.mxu0 0.0
        %1087 = vmatpush1.msra.mxu0 0.0
        %1088 = vmatprep.subr.mxu0 0.0
        %1089 = vmatpush1.msra.mxu0 0.0
        %1090 = vmatprep.subr.mxu0 0.0
        %1091 = vmatpush1.msra.mxu0 0.0
        %1092 = vmatprep.subr.mxu0 0.0
        %1093 = vmatpush1.msra.mxu0 0.0
        %1094 = vmatprep.subr.mxu0 0.0
        %1095 = vmatpush1.msra.mxu0 0.0
        %1096 = vmatprep.subr.mxu0 0.0
        %1097 = vmatpush1.msra.mxu0 0.0
        %1098 = vmatprep.subr.mxu0 0.0
        %1099 = vmatpush1.msra.mxu0 0.0
        %1100 = vmatprep.subr.mxu0 0.0
        %1101 = vmatpush1.msra.mxu0 0.0
        %1102 = vmatprep.subr.mxu0 0.0
        %1103 = vmatpush1.msra.mxu0 0.0
        %1104 = vmatprep.subr.mxu0 0.0
        %1105 = vmatpush1.msra.mxu0 0.0
        %1106 = vmatprep.subr.mxu0 0.0
        %1107 = vmatpush1.msra.mxu0 0.0
        %1108 = vmatprep.subr.mxu0 0.0
        %1109 = vmatpush1.msra.mxu0 0.0
        %1110 = vmatprep.subr.mxu0 0.0
        %1111 = vmatpush1.msra.mxu0 0.0
        %1112 = vmatprep.subr.mxu0 0.0
        %1113 = vmatpush1.msra.mxu0 0.0
        %1114 = vmatprep.subr.mxu0 0.0
        %1115 = vmatpush1.msra.mxu0 0.0
        %1116 = vmatprep.subr.mxu0 0.0
        %1117 = vmatpush1.msra.mxu0 0.0
        %1118 = vmatprep.subr.mxu0 0.0
        %1119 = vmatpush1.msra.mxu0 0.0
        %1120 = vmatprep.subr.mxu0 0.0
        %1121 = vmatpush1.msra.mxu0 0.0
        %1122 = vmatprep.subr.mxu0 0.0
        %1123 = vmatpush1.msra.mxu0 0.0
        %1124 = vmatprep.subr.mxu0 0.0
        %1125 = vmatpush1.msra.mxu0 0.0
        %1126 = vmatprep.subr.mxu0 0.0
        %1127 = vmatpush1.msra.mxu0 0.0
        %1128 = vmatprep.subr.mxu0 0.0
        %1129 = vmatpush1.msra.mxu0 0.0
        %1130 = vmatprep.subr.mxu0 0.0
        %1131 = vmatpush1.msra.mxu0 0.0
        %1132 = vmatprep.subr.mxu0 0.0
        %1133 = vmatpush1.msra.mxu0 0.0
        %1134 = vmatprep.subr.mxu0 0.0
        %1135 = vmatpush1.msra.mxu0 0.0
        %1136 = vmatprep.subr.mxu0 0.0
        %1137 = vmatpush1.msra.mxu0 0.0
        %1138 = vmatprep.subr.mxu0 0.0
        %1139 = vmatpush1.msra.mxu0 0.0
        %1140 = vmatprep.subr.mxu0 0.0
        %1141 = vmatpush1.msra.mxu0 0.0
        %1142 = vmatprep.subr.mxu0 0.0
        %1143 = vmatpush1.msra.mxu0 0.0
        %1144 = vmatprep.subr.mxu0 0.0
        %1145 = vmatpush1.msra.mxu0 0.0
        %1146 = vmatprep.mubr.f32.mxu0 0.0
        %1147 = vmatmul.mubr.f32.gmra.mrb[0].mxu0 %v1080
        %v1148 = vpop.f32.mrb[0].mxu0
        %v1149 = vadd.f32 0.0, %v1148
        %v1150 = vpop.f32.mrb[0].mxu0
        %1151 = vdwg.mxu0
        %v1152 = vadd.f32 %v1075, %v1149
        %1153 = vst.msk [vmem:[%s1068] sm:$0xff] %vm676, %v1152
        %1154 = vst.msk [vmem:[%s1043] sm:$0xff] %vm698, %v1048
        // Predicated region
        $region57: #{tpu_custom_call.1} parent=35 // pred_check
          %p1155 = pneg %p306
        $region58: #{tpu_custom_call.1} parent=35 // pred_check_branch
          %1157 = sbr.rel (%p1155) target = $region60
        $region59: #{tpu_custom_call.1} parent=35 // pred_region
          %v1158 = vld [vmem:[#allocation3] sm:$0xff]
          %v1159 = vrcp.pop %v1158
          %v1160 = vld [vmem:[#allocation4] sm:$0xff]
          %1162 = vset.pattern.permute.xlu0 0
          %1163 = vperm.xlu0 %1162, %v1159
          %v1164 = vpop.permute.xlu0 %1163
          %v1166 = vmul.f32 %v1160, %v1164
          %1167 = vst.msk [vmem:[%s305] sm:$0xff] %vm676, %v1166
          %v1168 = vld [vmem:[%s812] sm:$0xff]
          %v1169 = vrcp.pop %v1168
          %v1170 = vld [vmem:[%s820] sm:$0xff]
          %1172 = vset.pattern.permute.xlu0 0
          %1173 = vperm.xlu0 %1172, %v1169
          %v1174 = vpop.permute.xlu0 %1173
          %v1176 = vmul.f32 %v1170, %v1174
          %1178 = vrot.lane.b32.xlu0 %v1176, 8
          %v1179 = vpop.permute.xlu0 %1178
          %vm1181 = vcmask 130112
          %1182 = vst.msk [vmem:[%s305] sm:$0xff] %vm1181, %v1179
          %v1183 = vld [vmem:[%s936] sm:$0xff]
          %v1184 = vrcp.pop %v1183
          %v1185 = vld [vmem:[%s944] sm:$0xff]
          %1187 = vset.pattern.permute.xlu0 0
          %1188 = vperm.xlu0 %1187, %v1184
          %v1189 = vpop.permute.xlu0 %1188
          %v1191 = vmul.f32 %v1185, %v1189
          %1193 = vrot.lane.b32.xlu0 %v1191, 16
          %v1194 = vpop.permute.xlu0 %1193
          %vm1196 = vcmask 195712
          %1197 = vst.msk [vmem:[%s305] sm:$0xff] %vm1196, %v1194
          %v1198 = vld [vmem:[%s1060] sm:$0xff]
          %v1199 = vrcp.pop %v1198
          %v1200 = vld [vmem:[%s1068] sm:$0xff]
          %1202 = vset.pattern.permute.xlu0 0
          %1203 = vperm.xlu0 %1202, %v1199
          %v1204 = vpop.permute.xlu0 %1203
          %v1206 = vmul.f32 %v1200, %v1204
          %1208 = vrot.lane.b32.xlu0 %v1206, 24
          %v1209 = vpop.permute.xlu0 %1208
          %vm1211 = vcmask 261312
          %1212 = vst.msk [vmem:[%s305] sm:$0xff] %vm1211, %v1209
        $region60: #{tpu_custom_call.1} parent=35 // pred_fallthru
          _
        %s1213 = sand.u32 %s152, 1
        %s1214 = scalar_lea.sflag [#allocation7], %s1213
        %s1215 = sand.u32 %s152, 1
        %s1216 = smul.addr %s1215, 8
        %s1217 = scalar_lea.vmem [#allocation13], %s1216
        // Predicated region
        $region61: #{tpu_custom_call.1} parent=35 // pred_check
          %p1218 = pneg %p162
        $region62: #{tpu_custom_call.1} parent=35 // pred_check_branch
          %1220 = sbr.rel (%p1218) target = $region64
        $region63: #{tpu_custom_call.1} parent=35 // pred_region
          %s1222 = ssub.s32 128, 128
          %1223 = vsyncadd %s1214, %s1222
          %s1224 = sadd.s32 %s31, %s30
          %s1225 = smul.addr %s1224, 128
          %s1226 = scalar_lea.hbm %s4, %s1225
          %s1228 = sshll.u32 %s1217, 4
          %s1229 = int_to_ptr.vmem [resolvable:$true] %s1228
          %1231 = dma.vmem_to_hbm [thread:$0]  %s1229, 128, %s1226, %s1214
        $region64: #{tpu_custom_call.1} parent=35 // pred_fallthru
          _
      $region36: #{tpu_custom_call.1} parent=5 // pred_fallthru
        _
      %p1232 = scmp.le.s32.totalorder 2, %s20
      // Predicated region
      $region65: #{tpu_custom_call.1} parent=5 // pred_check
        %p1233 = pneg %p1232
      $region66: #{tpu_custom_call.1} parent=5 // pred_check_branch
        %1235 = sbr.rel (%p1233) target = $region68
      $region67: #{tpu_custom_call.1} parent=5 // pred_region
        %s1236 = ssub.s32 %s20, 2
        // Predicated region
        $region69: #{tpu_custom_call.1} parent=67 // pred_check
          %p1237 = pneg %p168
        $region70: #{tpu_custom_call.1} parent=67 // pred_check_branch
          %1239 = sbr.rel (%p1237) target = $region72
        $region71: #{tpu_custom_call.1} parent=67 // pred_region
          %s1240 = sand.u32 %s153, 1
          %s1241 = scalar_lea.sflag [#allocation7], %s1240
          %s1242 = sand.u32 %s153, 1
          %s1243 = smul.addr %s1242, 8
          %s1244 = scalar_lea.vmem [#allocation13], %s1243
          %1245 = dma.done %s1241, 128
        $region72: #{tpu_custom_call.1} parent=67 // pred_fallthru
          _
      $region68: #{tpu_custom_call.1} parent=5 // pred_fallthru
        _
    $region6: #{tpu_custom_call.1} parent=1 // loop_footer
      %s24 = sadd.s32 1, %s20
    $region7: #{tpu_custom_call.1} parent=1 // loop_footer_branch
      %19 = sbr.rel target = $region3
    $region8: #{tpu_custom_call.1} parent=1 // loop_exit
      _
    %1246 = vsyncpa [#allocation6], 1
    %s1247 = scalar_lea.sflag [#allocation6], 1
    %1248 = vsyncpa %s1247, 1
    %1249 = vsyncpa [#allocation9], 1
    %s1250 = scalar_lea.sflag [#allocation9], 1
    %1251 = vsyncpa %s1250, 1
    %1252 = vsyncpa [#allocation12], 1
    %1253 = vsyncpa [#allocation7], 1
    %s1254 = scalar_lea.sflag [#allocation7], 1
    %1255 = vsyncpa %s1254, 1

</llo_original>
